<compile_context>
chip_gen: v7x
topology: tpu7x:2x2x1
jax: 0.10.0
libtpu: 0.0.40
codegen_flags: <defaults>
</compile_context>

<pallas_src>
import math

import jax
import jax.numpy as jnp
from jax import lax
from jax.experimental import pallas as pl
from jax.experimental.pallas import tpu as pltpu


def _round_up(x: int, m: int) -> int:
    return ((x + m - 1) // m) * m


def _default_tiles():
    """Chip-aware (tm, tk) defaults: v5e 128x128, v7x 128x512, otherwise 256x512."""
    try:
        kind = jax.devices()[0].device_kind.lower().replace(" ", "")
    except Exception:
        kind = ""
    if "v5lite" in kind or "v5e" in kind:
        return 128, 128
    if "v7" in kind or "7x" in kind:
        return 128, 512
    return 256, 512


def _vmem_capacity_bytes(default=64 << 20):
    try:
        cap = getattr(pltpu.get_tpu_info(), "vmem_capacity_bytes", None)
        if cap:
            return int(cap)
    except Exception:
        pass
    return default


def _gin_two_pass_kernel(eps_ref, adj_ref, xs_ref, xd_ref, w_ref, b_ref,
                         rst_ref, e_ref,
                         neigh_acc, tanh_xd, m_scr, l_scr):
    ph = pl.program_id(1)            # 0: aggregation + softmax stats, 1: emit normalized e tiles
    k = pl.program_id(2)             # source-tile index
    n_k = pl.num_programs(2)
    neg_big = jnp.float32(-1e30)

    adj = adj_ref[...]                               # (tm, tk) bf16, 0/1
    mask = adj != 0                                  # built from bf16 directly (no f32 upcast)
    x_src = xs_ref[...].astype(jnp.bfloat16)         # bf16 MXU operand

    @pl.when((ph == 0) & (k == 0))
    def _init():
        x_dst = xd_ref[...]
        neigh_acc[...] = jnp.zeros_like(neigh_acc)
        tanh_xd[...] = jnp.tanh(x_dst).astype(tanh_xd.dtype)   # bf16 cache, once per dst tile
        m_scr[...] = jnp.full_like(m_scr, neg_big)
        l_scr[...] = jnp.zeros_like(l_scr)

    # ---- edge logits S[i, j] = sum_d tanh(x_dst[i, d]) * x_src[j, d]
    #      (NT matmul, bf16 x bf16 -> f32 accumulate on the MXU; needed in both phases)
    s = lax.dot_general(tanh_xd[...], x_src,
                        dimension_numbers=(((1,), (1,)), ((), ())),
                        preferred_element_type=jnp.float32)
    s = jnp.where(mask, s, neg_big)

    @pl.when(ph == 0)
    def _pass0():
        # sum aggregation (fn.copy_u + fn.sum): neigh += A_tile @ X_src_tile (bf16 -> f32 acc)
        neigh_acc[...] += jnp.dot(adj, x_src, preferred_element_type=jnp.float32)

        # online masked-softmax statistics (flash-style running max / rescaled sum)
        m_prev = m_scr[...]
        m_new = jnp.maximum(m_prev, jnp.max(s, axis=-1, keepdims=True))
        p = jnp.where(mask, jnp.exp(s - m_new), 0.0)
        l_scr[...] = jnp.exp(m_prev - m_new) * l_scr[...] + jnp.sum(p, axis=-1, keepdims=True)
        m_scr[...] = m_new

    @pl.when((ph == 0) & (k == n_k - 1))
    def _finalize_pass0():
        # node update + apply_func (Linear), once per dst tile (kept f32 for accuracy)
        x_dst = xd_ref[...]
        eps = eps_ref[0, 0]
        h = (1.0 + eps) * x_dst + neigh_acc[...]
        out = jnp.dot(h, w_ref[...], preferred_element_type=jnp.float32) + b_ref[...]
        rst_ref[...] = out.astype(rst_ref.dtype)
        # finalize softmax denominator: exact reciprocal, guard zero-in-degree / padded rows
        l = l_scr[...]
        l_scr[...] = 1.0 / jnp.where(l == 0.0, 1.0, l)

    @pl.when(ph == 1)
    def _pass1():
        # m_scr / l_scr hold the final row max / reciprocal row sum for this dst tile;
        # emit the normalized edge-softmax tile (0 at non-edges) as a dense lane-aligned block.
        p = jnp.where(mask, jnp.exp(s - m_scr[...]), 0.0)
        e_ref[...] = (p * l_scr[...]).astype(e_ref.dtype)


def gin_conv_forward(adj, x, w, b, eps, *, tm=None, tk=None):
    """GINConv forward (sum aggregator, Linear apply_func) on a dense adjacency.

    Returns (rst, [e_soft]): rst is [N_dst, D_out] float32; e_soft is the dense
    [N_dst, N_src] edge-softmax matrix in bfloat16 (0 at non-edges).
    """
    N_dst, N_src = adj.shape
    n_nodes, d_in = x.shape
    d_out = w.shape[1]

    dtm, dtk = _default_tiles()
    tm = dtm if tm is None else tm
    tk = dtk if tk is None else tk
    tm = min(tm, _round_up(N_dst, 8))        # dst (sublane) tile
    tk = min(tk, _round_up(N_src, 128))      # src (lane) tile
    np_dst = _round_up(N_dst, tm)
    np_src = _round_up(N_src, tk)
    dp_in = _round_up(d_in, 128)
    dp_out = _round_up(d_out, 128)
    n_i, n_k = np_dst // tm, np_src // tk

    f32, bf16 = jnp.float32, jnp.bfloat16
    # Pad once per call (hoist out of any repeated-call loop for large graphs).
    # Adjacency is 0/1 -> bf16 is lossless and halves its HBM traffic; the SAME padded x array
    # serves both the source and destination views (no duplication).
    adj_p = jnp.pad(adj.astype(bf16), ((0, np_dst - N_dst), (0, np_src - N_src)))
    lcm_tile = tm * tk // math.gcd(tm, tk)
    np_x = _round_up(max(np_dst, np_src, n_nodes), lcm_tile)
    x_p = jnp.pad(x.astype(f32), ((0, np_x - n_nodes), (0, dp_in - d_in)))
    w_p = jnp.pad(w.astype(f32), ((0, dp_in - d_in), (0, dp_out - d_out)))
    b_p = jnp.pad(b.astype(f32).reshape(1, -1), ((0, 0), (0, dp_out - d_out)))
    eps_arr = jnp.full((1, 1), eps, dtype=f32)

    # Explicit scoped-VMEM budget sized to the actual footprint (double-buffered tiles + scratch).
    est = (2 * tm * tk * 2            # adjacency tiles (bf16)
           + 2 * tk * dp_in * 4       # x_src tiles
           + 2 * tm * dp_in * 4       # x_dst tile
           + 2 * dp_in * dp_out * 4   # Linear weight
           + 2 * 8 * dp_out * 4       # Linear bias
           + 2 * tm * dp_out * 4      # rst output block
           + 2 * tm * tk * 2          # e output tiles (bf16)
           + tm * dp_in * (4 + 2)     # neigh accumulator (f32) + tanh cache (bf16)
           + 2 * tm * 128 * 4)        # m / l scratch (lane-padded)
    vmem_limit = min(max(2 * est, 32 << 20), _vmem_capacity_bytes())

    rst_p, e_p = pl.pallas_call(
        _gin_two_pass_kernel,
        out_shape=(jax.ShapeDtypeStruct((np_dst, dp_out), f32),
                   jax.ShapeDtypeStruct((np_dst, np_src), bf16)),
        grid=(n_i, 2, n_k),
        in_specs=[
            pl.BlockSpec(memory_space=pltpu.MemorySpace.SMEM),            # eps scalar
            pl.BlockSpec((tm, tk), lambda i, p, k: (i, k)),               # adjacency tile (bf16)
            pl.BlockSpec((tk, dp_in), lambda i, p, k: (k, 0)),            # X, source rows
            pl.BlockSpec((tm, dp_in), lambda i, p, k: (i, 0)),            # X, destination rows
            pl.BlockSpec((dp_in, dp_out), lambda i, p, k: (0, 0)),        # Linear weight
            pl.BlockSpec((1, dp_out), lambda i, p, k: (0, 0)),            # Linear bias
        ],
        out_specs=(
            pl.BlockSpec((tm, dp_out), lambda i, p, k: (i, 0)),           # rst (resident per i)
            pl.BlockSpec((tm, tk), lambda i, p, k: (i, k * p)),           # e tiles (phase 1)
        ),
        scratch_shapes=[
            pltpu.VMEM((tm, dp_in), f32),     # neighbour-sum accumulator
            pltpu.VMEM((tm, dp_in), bf16),    # tanh(x_dst) cache (bf16 MXU operand)
            pltpu.VMEM((tm, 1), f32),         # running / final row max
            pltpu.VMEM((tm, 1), f32),         # running row sum -> reciprocal
        ],
        compiler_params=pltpu.CompilerParams(
            dimension_semantics=("parallel", "arbitrary", "arbitrary"),
            vmem_limit_bytes=int(vmem_limit)),
    )(eps_arr, adj_p, x_p, x_p, w_p, b_p)

    return rst_p[:N_dst, :d_out], [e_p[:N_dst, :N_src]]


def _reference(adj, x, w, b, eps):
    """Pure-JAX float32 reference matching the PyTorch module's forward."""
    neigh = adj @ x
    rst = ((1.0 + eps) * x + neigh) @ w + b[None, :]
    s = jnp.tanh(x) @ x.T
    mask = adj > 0.0
    s_m = jnp.where(mask, s, -jnp.inf)
    m = jnp.max(s_m, axis=-1, keepdims=True)
    m = jnp.where(jnp.isfinite(m), m, 0.0)
    p = jnp.where(mask, jnp.exp(s_m - m), 0.0)
    denom = jnp.sum(p, axis=-1, keepdims=True)
    denom = jnp.where(denom == 0.0, 1.0, denom)
    return rst, p / denom


if __name__ == "__main__":
    key = jax.random.PRNGKey(0)
    k_adj, k_x, k_w, k_b = jax.random.split(key, 4)

    N = 64          # number of nodes
    D_IN = 32       # input feature dim
    D_OUT = 32      # output feature dim of apply_func (Linear)
    init_eps = 0.0  # GINConv default (learn_eps=False)

    # deterministic random graph (dense adjacency, ~25% edge density)
    adj = (jax.random.uniform(k_adj, (N, N)) < 0.25).astype(jnp.float32)
    x = jax.random.normal(k_x, (N, D_IN), dtype=jnp.float32)

    # deterministic Linear params (torch.nn.Linear-style uniform init)
    bound = 1.0 / math.sqrt(D_IN)
    w = jax.random.uniform(k_w, (D_IN, D_OUT), minval=-bound, maxval=bound, dtype=jnp.float32)
    b = jax.random.uniform(k_b, (D_OUT,), minval=-bound, maxval=bound, dtype=jnp.float32)

    rst, elist = gin_conv_forward(adj, x, w, b, init_eps)
    e_soft = elist[0]
    jax.block_until_ready(rst)
    jax.block_until_ready(e_soft)

    rst_ref, e_expected = _reference(adj, x, w, b, init_eps)
    # Tolerances reflect bf16 MXU operands (adjacency is exact in bf16; x / tanh(x) are rounded)
    # and the bf16 edge-softmax output.
    assert jnp.allclose(rst, rst_ref, atol=3e-2, rtol=2e-2), \
        float(jnp.max(jnp.abs(rst - rst_ref)))
    e_f32 = e_soft.astype(jnp.float32)
    assert jnp.allclose(e_f32, e_expected, atol=3e-2, rtol=5e-2), \
        float(jnp.max(jnp.abs(e_f32 - e_expected)))

    # TODO(synk): DGL returns edge_softmax as a per-edge vector in COO order; here it is the
    # equivalent dense [N_dst, N_src] matrix (0 at non-edges, bfloat16). Only the 'sum'
    # aggregator and a Linear apply_func are implemented.
    print("KERNEL_OK")
</pallas_src>

<mosaic_0001>
module attributes {stable_mosaic.version = 11 : i64} {
  func.func @_gin_two_pass_kernel(%arg0: i32, %arg1: i32, %arg2: i32, %arg3: memref<1x1xf32, #tpu.memory_space<smem>>, %arg4: memref<64x128xbf16, #tpu.memory_space<vmem>>, %arg5: memref<128x128xf32, #tpu.memory_space<vmem>>, %arg6: memref<64x128xf32, #tpu.memory_space<vmem>>, %arg7: memref<128x128xf32, #tpu.memory_space<vmem>>, %arg8: memref<1x128xf32, #tpu.memory_space<vmem>>, %arg9: memref<64x128xf32, #tpu.memory_space<vmem>>, %arg10: memref<64x128xbf16, #tpu.memory_space<vmem>>, %arg11: memref<64x128xf32, #tpu.memory_space<vmem>>, %arg12: memref<64x128xbf16, #tpu.memory_space<vmem>>, %arg13: memref<64x1xf32, #tpu.memory_space<vmem>>, %arg14: memref<64x1xf32, #tpu.memory_space<vmem>>) attributes {dimension_semantics = [#tpu.dimension_semantics<parallel>, #tpu.dimension_semantics<arbitrary>, #tpu.dimension_semantics<arbitrary>], iteration_bounds = array<i64: 1, 2, 1>, scalar_prefetch = 0 : i64, scratch_operands = 4 : i64, tpu.core_type = #tpu.core_type<tc>, window_params = [{transform_indices = @transform_0, window_bounds = array<i64: 1, 1>}, {transform_indices = @transform_1, window_bounds = array<i64: 64, 128>}, {transform_indices = @transform_2, window_bounds = array<i64: 128, 128>}, {transform_indices = @transform_3, window_bounds = array<i64: 64, 128>}, {pipeline_mode = #tpu.pipeline_mode<synchronous>, transform_indices = @transform_4, window_bounds = array<i64: 128, 128>}, {pipeline_mode = #tpu.pipeline_mode<synchronous>, transform_indices = @transform_5, window_bounds = array<i64: 1, 128>}, {transform_indices = @transform_6, window_bounds = array<i64: 64, 128>}, {transform_indices = @transform_7, window_bounds = array<i64: 64, 128>}]} {
    %c0 = arith.constant 0 : index
    %c0_0 = arith.constant 0 : index
    %0 = vector.load %arg4[%c0, %c0_0] : memref<64x128xbf16, #tpu.memory_space<vmem>>, vector<64x128xbf16>
    %cst = arith.constant 0.000000e+00 : bf16
    %1 = vector.broadcast %cst : bf16 to vector<64x128xbf16>
    %2 = arith.cmpf one, %0, %1 : vector<64x128xbf16>
    %c0_1 = arith.constant 0 : index
    %c0_2 = arith.constant 0 : index
    %3 = vector.load %arg5[%c0_1, %c0_2] : memref<128x128xf32, #tpu.memory_space<vmem>>, vector<128x128xf32>
    %4 = arith.truncf %3 : vector<128x128xf32> to vector<128x128xbf16>
    %c0_i32 = arith.constant 0 : i32
    %5 = arith.cmpi eq, %arg1, %c0_i32 : i32
    %c0_i32_3 = arith.constant 0 : i32
    %6 = arith.cmpi eq, %arg2, %c0_i32_3 : i32
    %7 = arith.andi %5, %6 : i1
    %8 = arith.extui %7 : i1 to i32
    %cst_4 = arith.constant -1.000000e+30 : f32
    %c0_i32_5 = arith.constant 0 : i32
    %9 = arith.cmpi ne, %8, %c0_i32_5 : i32
    scf.if %9 {
      %c0_16 = arith.constant 0 : index
      %c0_17 = arith.constant 0 : index
      %25 = vector.load %arg6[%c0_16, %c0_17] : memref<64x128xf32, #tpu.memory_space<vmem>>, vector<64x128xf32>
      %cst_18 = arith.constant 0.000000e+00 : f32
      %26 = vector.broadcast %cst_18 : f32 to vector<64x128xf32>
      %c0_19 = arith.constant 0 : index
      %c0_20 = arith.constant 0 : index
      %27 = vector.load %arg11[%c0_19, %c0_20] : memref<64x128xf32, #tpu.memory_space<vmem>>, vector<64x128xf32>
      tpu.vector_store %arg11[%c0_19, %c0_20], %26 {strides = array<i32>} : memref<64x128xf32, #tpu.memory_space<vmem>>, vector<64x128xf32>,
      %28 = math.tanh %25 : vector<64x128xf32>
      %29 = arith.truncf %28 : vector<64x128xf32> to vector<64x128xbf16>
      %c0_21 = arith.constant 0 : index
      %c0_22 = arith.constant 0 : index
      %30 = vector.load %arg12[%c0_21, %c0_22] : memref<64x128xbf16, #tpu.memory_space<vmem>>, vector<64x128xbf16>
      tpu.vector_store %arg12[%c0_21, %c0_22], %29 {strides = array<i32>} : memref<64x128xbf16, #tpu.memory_space<vmem>>, vector<64x128xbf16>,
      %31 = vector.broadcast %cst_4 : f32 to vector<64x1xf32>
      %c0_23 = arith.constant 0 : index
      %c0_24 = arith.constant 0 : index
      %32 = vector.load %arg13[%c0_23, %c0_24] : memref<64x1xf32, #tpu.memory_space<vmem>>, vector<64x1xf32>
      tpu.vector_store %arg13[%c0_23, %c0_24], %31 {strides = array<i32>} : memref<64x1xf32, #tpu.memory_space<vmem>>, vector<64x1xf32>,
      %cst_25 = arith.constant 0.000000e+00 : f32
      %33 = vector.broadcast %cst_25 : f32 to vector<64x1xf32>
      %c0_26 = arith.constant 0 : index
      %c0_27 = arith.constant 0 : index
      %34 = vector.load %arg14[%c0_26, %c0_27] : memref<64x1xf32, #tpu.memory_space<vmem>>, vector<64x1xf32>
      tpu.vector_store %arg14[%c0_26, %c0_27], %33 {strides = array<i32>} : memref<64x1xf32, #tpu.memory_space<vmem>>, vector<64x1xf32>,
    } else {
    }
    %c0_6 = arith.constant 0 : index
    %c0_7 = arith.constant 0 : index
    %10 = vector.load %arg12[%c0_6, %c0_7] : memref<64x128xbf16, #tpu.memory_space<vmem>>, vector<64x128xbf16>
    %cst_8 = arith.constant dense<0.000000e+00> : vector<64x128xf32>
    %11 = tpu.matmul %10, %4, %cst_8 {dimension_numbers = #tpu.dot_dimension_numbers<[1], [1], [0], [0], [0, 0, 1, 0], [], []>} : vector<64x128xbf16>, vector<128x128xbf16>, vector<64x128xf32> -> vector<64x128xf32>
    %cst_9 = arith.constant -1.000000e+30 : f32
    %12 = vector.broadcast %cst_9 : f32 to vector<64x128xf32>
    %13 = arith.select %2, %11, %12 : vector<64x128xi1>, vector<64x128xf32>
    %c0_i32_10 = arith.constant 0 : i32
    %14 = arith.cmpi eq, %arg1, %c0_i32_10 : i32
    %15 = arith.extui %14 : i1 to i32
    %c0_i32_11 = arith.constant 0 : i32
    %16 = arith.cmpi ne, %15, %c0_i32_11 : i32
    scf.if %16 {
      %c0_16 = arith.constant 0 : index
      %c0_17 = arith.constant 0 : index
      %25 = vector.load %arg11[%c0_16, %c0_17] : memref<64x128xf32, #tpu.memory_space<vmem>>, vector<64x128xf32>
      %cst_18 = arith.constant dense<0.000000e+00> : vector<64x128xf32>
      %26 = tpu.matmul %0, %4, %cst_18 {dimension_numbers = #tpu.dot_dimension_numbers<[1], [0], [0], [1], [0, 0, 1, 1], [], []>} : vector<64x128xbf16>, vector<128x128xbf16>, vector<64x128xf32> -> vector<64x128xf32>
      %27 = arith.addf %25, %26 : vector<64x128xf32>
      %c0_19 = arith.constant 0 : index
      %c0_20 = arith.constant 0 : index
      %28 = vector.load %arg11[%c0_19, %c0_20] : memref<64x128xf32, #tpu.memory_space<vmem>>, vector<64x128xf32>
      tpu.vector_store %arg11[%c0_19, %c0_20], %27 {strides = array<i32>} : memref<64x128xf32, #tpu.memory_space<vmem>>, vector<64x128xf32>,
      %c0_21 = arith.constant 0 : index
      %c0_22 = arith.constant 0 : index
      %29 = vector.load %arg13[%c0_21, %c0_22] : memref<64x1xf32, #tpu.memory_space<vmem>>, vector<64x1xf32>
      %cst_23 = arith.constant dense<0xFF800000> : vector<64xf32>
      %30 = vector.multi_reduction <maximumf>, %13, %cst_23 [1] : vector<64x128xf32> to vector<64xf32>
      %31 = vector.shape_cast %30 : vector<64xf32> to vector<64x1xf32>
      %32 = arith.maximumf %29, %31 : vector<64x1xf32>
      %33 = vector.broadcast %32 : vector<64x1xf32> to vector<64x128xf32>
      %34 = arith.subf %13, %33 : vector<64x128xf32>
      %35 = math.exp %34 : vector<64x128xf32>
      %cst_24 = arith.constant 0.000000e+00 : f32
      %36 = vector.broadcast %cst_24 : f32 to vector<64x128xf32>
      %37 = arith.select %2, %35, %36 : vector<64x128xi1>, vector<64x128xf32>
      %38 = arith.subf %29, %32 : vector<64x1xf32>
      %39 = math.exp %38 : vector<64x1xf32>
      %c0_25 = arith.constant 0 : index
      %c0_26 = arith.constant 0 : index
      %40 = vector.load %arg14[%c0_25, %c0_26] : memref<64x1xf32, #tpu.memory_space<vmem>>, vector<64x1xf32>
      %41 = arith.mulf %39, %40 : vector<64x1xf32>
      %cst_27 = arith.constant dense<0.000000e+00> : vector<64xf32>
      %42 = vector.multi_reduction <add>, %37, %cst_27 [1] : vector<64x128xf32> to vector<64xf32>
      %43 = vector.shape_cast %42 : vector<64xf32> to vector<64x1xf32>
      %44 = arith.addf %41, %43 : vector<64x1xf32>
      %c0_28 = arith.constant 0 : index
      %c0_29 = arith.constant 0 : index
      %45 = vector.load %arg14[%c0_28, %c0_29] : memref<64x1xf32, #tpu.memory_space<vmem>>, vector<64x1xf32>
      tpu.vector_store %arg14[%c0_28, %c0_29], %44 {strides = array<i32>} : memref<64x1xf32, #tpu.memory_space<vmem>>, vector<64x1xf32>,
      %c0_30 = arith.constant 0 : index
      %c0_31 = arith.constant 0 : index
      %46 = vector.load %arg13[%c0_30, %c0_31] : memref<64x1xf32, #tpu.memory_space<vmem>>, vector<64x1xf32>
      tpu.vector_store %arg13[%c0_30, %c0_31], %32 {strides = array<i32>} : memref<64x1xf32, #tpu.memory_space<vmem>>, vector<64x1xf32>,
    } else {
    }
    %c0_i32_12 = arith.constant 0 : i32
    %17 = arith.cmpi eq, %arg1, %c0_i32_12 : i32
    %c0_i32_13 = arith.constant 0 : i32
    %18 = arith.cmpi eq, %arg2, %c0_i32_13 : i32
    %19 = arith.andi %17, %18 : i1
    %20 = arith.extui %19 : i1 to i32
    %c0_i32_14 = arith.constant 0 : i32
    %21 = arith.cmpi ne, %20, %c0_i32_14 : i32
    scf.if %21 {
      %c0_16 = arith.constant 0 : index
      %c0_17 = arith.constant 0 : index
      %25 = vector.load %arg6[%c0_16, %c0_17] : memref<64x128xf32, #tpu.memory_space<vmem>>, vector<64x128xf32>
      %c0_18 = arith.constant 0 : index
      %c0_19 = arith.constant 0 : index
      %26 = memref.load %arg3[%c0_18, %c0_19] : memref<1x1xf32, #tpu.memory_space<smem>>
      %cst_20 = arith.constant 1.000000e+00 : f32
      %27 = arith.addf %cst_20, %26 : f32
      %28 = vector.broadcast %27 : f32 to vector<64x128xf32>
      %29 = arith.mulf %28, %25 : vector<64x128xf32>
      %c0_21 = arith.constant 0 : index
      %c0_22 = arith.constant 0 : index
      %30 = vector.load %arg11[%c0_21, %c0_22] : memref<64x128xf32, #tpu.memory_space<vmem>>, vector<64x128xf32>
      %31 = arith.addf %29, %30 : vector<64x128xf32>
      %c0_23 = arith.constant 0 : index
      %c0_24 = arith.constant 0 : index
      %32 = vector.load %arg7[%c0_23, %c0_24] : memref<128x128xf32, #tpu.memory_space<vmem>>, vector<128x128xf32>
      %cst_25 = arith.constant dense<0.000000e+00> : vector<64x128xf32>
      %33 = tpu.matmul %31, %32, %cst_25 {dimension_numbers = #tpu.dot_dimension_numbers<[1], [0], [0], [1], [0, 0, 1, 1], [], []>} : vector<64x128xf32>, vector<128x128xf32>, vector<64x128xf32> -> vector<64x128xf32>
      %c0_26 = arith.constant 0 : index
      %c0_27 = arith.constant 0 : index
      %34 = vector.load %arg8[%c0_26, %c0_27] : memref<1x128xf32, #tpu.memory_space<vmem>>, vector<1x128xf32>
      %35 = vector.broadcast %34 : vector<1x128xf32> to vector<64x128xf32>
      %36 = arith.addf %33, %35 : vector<64x128xf32>
      %c0_28 = arith.constant 0 : index
      %c0_29 = arith.constant 0 : index
      %37 = vector.load %arg9[%c0_28, %c0_29] : memref<64x128xf32, #tpu.memory_space<vmem>>, vector<64x128xf32>
      tpu.vector_store %arg9[%c0_28, %c0_29], %36 {strides = array<i32>} : memref<64x128xf32, #tpu.memory_space<vmem>>, vector<64x128xf32>,
      %c0_30 = arith.constant 0 : index
      %c0_31 = arith.constant 0 : index
      %38 = vector.load %arg14[%c0_30, %c0_31] : memref<64x1xf32, #tpu.memory_space<vmem>>, vector<64x1xf32>
      %cst_32 = arith.constant 0.000000e+00 : f32
      %39 = vector.broadcast %cst_32 : f32 to vector<64x1xf32>
      %40 = arith.cmpf oeq, %38, %39 : vector<64x1xf32>
      %cst_33 = arith.constant 1.000000e+00 : f32
      %41 = vector.broadcast %cst_33 : f32 to vector<64x1xf32>
      %42 = arith.select %40, %41, %38 : vector<64x1xi1>, vector<64x1xf32>
      %cst_34 = arith.constant 1.000000e+00 : f32
      %43 = vector.broadcast %cst_34 : f32 to vector<64x1xf32>
      %44 = arith.divf %43, %42 : vector<64x1xf32>
      %c0_35 = arith.constant 0 : index
      %c0_36 = arith.constant 0 : index
      %45 = vector.load %arg14[%c0_35, %c0_36] : memref<64x1xf32, #tpu.memory_space<vmem>>, vector<64x1xf32>
      tpu.vector_store %arg14[%c0_35, %c0_36], %44 {strides = array<i32>} : memref<64x1xf32, #tpu.memory_space<vmem>>, vector<64x1xf32>,
    } else {
    }
    %c1_i32 = arith.constant 1 : i32
    %22 = arith.cmpi eq, %arg1, %c1_i32 : i32
    %23 = arith.extui %22 : i1 to i32
    %c0_i32_15 = arith.constant 0 : i32
    %24 = arith.cmpi ne, %23, %c0_i32_15 : i32
    scf.if %24 {
      %c0_16 = arith.constant 0 : index
      %c0_17 = arith.constant 0 : index
      %25 = vector.load %arg13[%c0_16, %c0_17] : memref<64x1xf32, #tpu.memory_space<vmem>>, vector<64x1xf32>
      %26 = vector.broadcast %25 : vector<64x1xf32> to vector<64x128xf32>
      %27 = arith.subf %13, %26 : vector<64x128xf32>
      %28 = math.exp %27 : vector<64x128xf32>
      %cst_18 = arith.constant 0.000000e+00 : f32
      %29 = vector.broadcast %cst_18 : f32 to vector<64x128xf32>
      %30 = arith.select %2, %28, %29 : vector<64x128xi1>, vector<64x128xf32>
      %c0_19 = arith.constant 0 : index
      %c0_20 = arith.constant 0 : index
      %31 = vector.load %arg14[%c0_19, %c0_20] : memref<64x1xf32, #tpu.memory_space<vmem>>, vector<64x1xf32>
      %32 = vector.broadcast %31 : vector<64x1xf32> to vector<64x128xf32>
      %33 = arith.mulf %30, %32 : vector<64x128xf32>
      %34 = arith.truncf %33 : vector<64x128xf32> to vector<64x128xbf16>
      %c0_21 = arith.constant 0 : index
      %c0_22 = arith.constant 0 : index
      %35 = vector.load %arg10[%c0_21, %c0_22] : memref<64x128xbf16, #tpu.memory_space<vmem>>, vector<64x128xbf16>
      tpu.vector_store %arg10[%c0_21, %c0_22], %34 {strides = array<i32>} : memref<64x128xbf16, #tpu.memory_space<vmem>>, vector<64x128xbf16>,
    } else {
    }
    return
  }
  func.func @transform_0(%arg0: i32, %arg1: i32, %arg2: i32) -> (i32, i32) {
    %c0_i32 = arith.constant 0 : i32
    %c0_i32_0 = arith.constant 0 : i32
    %c0_i32_1 = arith.constant 0 : i32
    return %c0_i32, %c0_i32_0 : i32, i32
  }
  func.func @transform_1(%arg0: i32, %arg1: i32, %arg2: i32) -> (i32, i32) {
    %c0_i32 = arith.constant 0 : i32
    return %arg0, %arg2 : i32, i32
  }
  func.func @transform_2(%arg0: i32, %arg1: i32, %arg2: i32) -> (i32, i32) {
    %c0_i32 = arith.constant 0 : i32
    %c0_i32_0 = arith.constant 0 : i32
    return %arg2, %c0_i32 : i32, i32
  }
  func.func @transform_3(%arg0: i32, %arg1: i32, %arg2: i32) -> (i32, i32) {
    %c0_i32 = arith.constant 0 : i32
    %c0_i32_0 = arith.constant 0 : i32
    return %arg0, %c0_i32 : i32, i32
  }
  func.func @transform_4(%arg0: i32, %arg1: i32, %arg2: i32) -> (i32, i32) {
    %c0_i32 = arith.constant 0 : i32
    %c0_i32_0 = arith.constant 0 : i32
    %c0_i32_1 = arith.constant 0 : i32
    return %c0_i32, %c0_i32_0 : i32, i32
  }
  func.func @transform_5(%arg0: i32, %arg1: i32, %arg2: i32) -> (i32, i32) {
    %c0_i32 = arith.constant 0 : i32
    %c0_i32_0 = arith.constant 0 : i32
    %c0_i32_1 = arith.constant 0 : i32
    return %c0_i32, %c0_i32_0 : i32, i32
  }
  func.func @transform_6(%arg0: i32, %arg1: i32, %arg2: i32) -> (i32, i32) {
    %c0_i32 = arith.constant 0 : i32
    %c0_i32_0 = arith.constant 0 : i32
    return %arg0, %c0_i32 : i32, i32
  }
  func.func @transform_7(%arg0: i32, %arg1: i32, %arg2: i32) -> (i32, i32) {
    %0 = arith.muli %arg2, %arg1 : i32
    %c0_i32 = arith.constant 0 : i32
    return %arg0, %0 : i32, i32
  }
}

</mosaic_0001>

<llo_original>
// kernel: tpu_custom_call.1
$region0: #{tpu_custom_call.1}
  #allocation0 [shape = 'u32[]', space=smem, size = 0x4, offset = 0x4, fixed_abs, tag = 'smem constant byte address 0x4 - core index']
  #allocation1 [shape = 'u32[144,128]{1,0:T(1,128)}', space=vmem, size = 0x12000, scoped, tag = 'internal scratch']
  #allocation2 [shape = 'f32[64,128]{1,0:T(8,128)}', space=vmem, size = 0x8000, scoped, tag = 'scratch operand']
  #allocation3 [shape = 'bf16[64,128]{1,0:T(16,128)(2,1)}', space=vmem, size = 0x4000, scoped, tag = 'scratch operand']
  #allocation4 [shape = 'f32[64,1]{1,0:T(8,128)}', space=vmem, size = 0x8000, scoped, tag = 'scratch operand']
  #allocation5 [shape = 'f32[64,1]{1,0:T(8,128)}', space=vmem, size = 0x8000, scoped, tag = 'scratch operand']
  #allocation6 [shape = 'f32[1,1]{1,0:T(1,128)S(6)}', space=smem, size = 0x200, scoped, tag = 'scoped memory for tpu_custom_call.1']
  %s0 = inlined_call_operand.<no memory space> [shape: f32[1,1], index: 0, kind: input, shape index: {}]
  %s1 = inlined_call_operand.hbm [shape: bf16[64,128], index: 1, kind: input, shape index: {}]
  %s2 = inlined_call_operand.hbm [shape: f32[128,128], index: 2, kind: input, shape index: {}]
  %s3 = inlined_call_operand.hbm [shape: f32[128,128], index: 3, kind: input, shape index: {}]
  %s4 = inlined_call_operand.hbm [shape: f32[128,128], index: 4, kind: input, shape index: {}]
  %s5 = inlined_call_operand.vmem [shape: f32[1,128], index: 5, kind: input, shape index: {}]
  %s6 = inlined_call_operand.hbm [shape: f32[64,128], index: 6, kind: output, shape index: {0}]
  %s7 = inlined_call_operand.hbm [shape: bf16[64,128], index: 7, kind: output, shape index: {1}]
  %8 = xla_tuple %s6, %s7
  %s9 = sld [smem:[#allocation0]]
  $region97: #{tpu_custom_call.1} parent=0
    _
  %s11 = ssub.s32 1, %s9
  %s12 = scalar_select 0, %s11, %s9
  %13 = sst [smem:[#allocation6]] %s0
  $region1: #{tpu_custom_call.1} parent=0
    #allocation7 [shape = 'u8[16384]{0}', space=vmem, size = 0x4000, scoped, tag = 'input window, operand 1, single buffered']
    #allocation8 [shape = 's32[2]{0}', space=sflag, size = 0x8, scoped, tag = 'scoped memory for tpu_custom_call.1']
    #allocation9 [shape = 's32[2]{0}', space=sflag, size = 0x8, scoped, tag = 'scoped memory for tpu_custom_call.1']
    #allocation10 [shape = 'u8[65536]{0}', space=vmem, size = 0x10000, scoped, tag = 'input window, operand 2, single buffered']
    #allocation11 [shape = 's32[1]{0}', space=sflag, size = 0x4, scoped, tag = 'scoped memory for tpu_custom_call.1']
    #allocation12 [shape = 'u8[32768]{0}', space=vmem, size = 0x8000, scoped, tag = 'input window, operand 3, single buffered']
    #allocation13 [shape = 'u8[65536]{0}', space=vmem, size = 0x10000, scoped, tag = 'input window, operand 4, single buffered']
    #allocation14 [shape = 's32[1]{0}', space=sflag, size = 0x4, scoped, tag = 'scoped memory for tpu_custom_call.1']
    #allocation15 [shape = 'u8[32768]{0}', space=vmem, size = 0x8000, scoped, tag = 'output window, operand 0, single buffered']
    #allocation16 [shape = 'u8[32768]{0}', space=vmem, size = 0x8000, scoped, tag = 'output window, operand 1']
    #allocation17 [shape = 's32[2]{0}', space=sflag, size = 0x8, scoped, tag = 'scoped memory for tpu_custom_call.1']
    %14 = vsyncpa [#allocation8], 0
    %15 = vsyncpa [#allocation11], 0
    %16 = vsyncpa [#allocation14], 0
    %17 = vsyncpa [#allocation9], 0
    %18 = vsyncpa [#allocation17], 0
    %s19 = scalar_lea.sflag [#allocation17], 1
    %20 = vsyncpa %s19, 0
    loop: start=0, step=1, limit=4
    $region2: #{tpu_custom_call.1} parent=1 // loop_pre_header
      _
    $region3: #{tpu_custom_call.1} parent=1 // loop_header
      %s22 = sphi 0, %s26
      %p23 = scmp.ge.s32.totalorder %s22, 4
      %s29 = sphi 0, %s48
      %s30 = sphi 0, %s44
      %s31 = sphi 0, %s40
      %s32 = sphi 0, %s29
      %s33 = sphi 0, %s30
      %s34 = sphi 0, %s31
      %s35 = sphi 0, %s32
      %s36 = sphi 0, %s33
      %s37 = sphi 0, %s34
      %s49 = sphi 0, %s49
      %s51 = sphi 0, %s49
      %s52 = sphi 0, %s51
      %s66 = sphi 0, %s52
      %s74 = sphi 0, %s76
      %s77 = sphi 0, %s74
      %s78 = sphi 0, %s77
      %s94 = sphi 0, %s78
      %s100 = sphi 0, %s102
      %s103 = sphi 0, %s100
      %s104 = sphi 0, %s103
      %s120 = sphi 0, %s104
      %s126 = sphi 0, %s128
      %s129 = sphi 0, %s126
      %s130 = sphi 0, %s129
      %s146 = sphi 0, %s130
      %s150 = sphi 0, %s150
      %s152 = sphi 0, %s150
      %s153 = sphi 0, %s152
      %s167 = sphi 0, %s153
      %s171 = sphi 0, %s171
      %s173 = sphi 0, %s171
      %s174 = sphi 0, %s173
      %s188 = sphi 0, %s174
      %s194 = sphi 0, %s196
      %s197 = sphi 0, %s194
      %s198 = sphi 0, %s197
      %s214 = sphi 0, %s198
      %s224 = sphi 0, %s226
      %s227 = sphi 0, %s224
      %s228 = sphi 0, %s227
      %s244 = sphi 0, %s228
    $region4: #{tpu_custom_call.1} parent=1 // loop_header_branch
      %25 = sbr.rel (%p23) target = $region8
    $region5: #{tpu_custom_call.1} parent=1 // loop_body
      %s27 = ssub.s32 %s22, 1
      %s28 = ssub.s32 %s22, 2
      %s38 = sadd.s32 1, %s31
      %p39 = scmp.ge.s32.totalorder %s38, 1
      %s40 = scalar_select %p39, 0, %s38
      %s41 = sadd.s32 1, %s30
      %s42 = scalar_select %p39, %s41, %s30
      %p43 = scmp.ge.s32.totalorder %s42, 2
      %s44 = scalar_select %p43, 0, %s42
      %s45 = sadd.s32 1, %s29
      %s46 = scalar_select %p43, %s45, %s29
      %p47 = scmp.ge.s32.totalorder %s46, 1
      %s48 = scalar_select %p47, 0, %s46
      %s50 = sadd.s32 %s49, 1
      %p53 = scmp.eq.s32.totalorder %s22, 1
      %p54 = scmp.ne.s32.totalorder %s49, %s51
      %p55 = scmp.eq.s32.totalorder %s22, 0
      %p56 = por %p54, %p55
      %p57 = scmp.ne.s32.totalorder %s49, %s51
      %p58 = scmp.eq.s32.totalorder %s27, 1
      %p59 = por %p57, %p58
      %p60 = scmp.ne.s32.totalorder %s51, %s52
      %p61 = scmp.eq.s32.totalorder %s27, 0
      %p62 = por %p60, %p61
      %p63 = scmp.ne.s32.totalorder %s51, %s52
      %p64 = scmp.eq.s32.totalorder %s28, 1
      %p65 = por %p63, %p64
      %p67 = scmp.ne.s32.totalorder %s52, %s66
      %p68 = scmp.eq.s32.totalorder %s28, 0
      %p69 = por %p67, %p68
      %s70 = ssub.s32 %s29, %s48
      %s71 = ssub.s32 %s31, %s40
      %s72 = sor.u32 %s70, %s71
      %p73 = scmp.eq.s32.totalorder %s72, 0
      %s75 = sadd.s32 %s74, 1
      %s76 = scalar_select %p73, %s74, %s75
      %p79 = pneg %p73
      %p80 = scmp.eq.s32.totalorder %s22, 1
      %p81 = por %p79, %p80
      %p82 = scmp.ne.s32.totalorder %s74, %s77
      %p83 = scmp.eq.s32.totalorder %s22, 0
      %p84 = por %p82, %p83
      %p85 = scmp.ne.s32.totalorder %s74, %s77
      %p86 = scmp.eq.s32.totalorder %s27, 1
      %p87 = por %p85, %p86
      %p88 = scmp.ne.s32.totalorder %s77, %s78
      %p89 = scmp.eq.s32.totalorder %s27, 0
      %p90 = por %p88, %p89
      %p91 = scmp.ne.s32.totalorder %s77, %s78
      %p92 = scmp.eq.s32.totalorder %s28, 1
      %p93 = por %p91, %p92
      %p95 = scmp.ne.s32.totalorder %s78, %s94
      %p96 = scmp.eq.s32.totalorder %s28, 0
      %p97 = por %p95, %p96
      %s98 = ssub.s32 %s31, %s40
      %p99 = scmp.eq.s32.totalorder %s98, 0
      %s101 = sadd.s32 %s100, 1
      %s102 = scalar_select %p99, %s100, %s101
      %p105 = pneg %p99
      %p106 = scmp.eq.s32.totalorder %s22, 1
      %p107 = por %p105, %p106
      %p108 = scmp.ne.s32.totalorder %s100, %s103
      %p109 = scmp.eq.s32.totalorder %s22, 0
      %p110 = por %p108, %p109
      %p111 = scmp.ne.s32.totalorder %s100, %s103
      %p112 = scmp.eq.s32.totalorder %s27, 1
      %p113 = por %p111, %p112
      %p114 = scmp.ne.s32.totalorder %s103, %s104
      %p115 = scmp.eq.s32.totalorder %s27, 0
      %p116 = por %p114, %p115
      %p117 = scmp.ne.s32.totalorder %s103, %s104
      %p118 = scmp.eq.s32.totalorder %s28, 1
      %p119 = por %p117, %p118
      %p121 = scmp.ne.s32.totalorder %s104, %s120
      %p122 = scmp.eq.s32.totalorder %s28, 0
      %p123 = por %p121, %p122
      %s124 = ssub.s32 %s29, %s48
      %p125 = scmp.eq.s32.totalorder %s124, 0
      %s127 = sadd.s32 %s126, 1
      %s128 = scalar_select %p125, %s126, %s127
      %p131 = pneg %p125
      %p132 = scmp.eq.s32.totalorder %s22, 1
      %p133 = por %p131, %p132
      %p134 = scmp.ne.s32.totalorder %s126, %s129
      %p135 = scmp.eq.s32.totalorder %s22, 0
      %p136 = por %p134, %p135
      %p137 = scmp.ne.s32.totalorder %s126, %s129
      %p138 = scmp.eq.s32.totalorder %s27, 1
      %p139 = por %p137, %p138
      %p140 = scmp.ne.s32.totalorder %s129, %s130
      %p141 = scmp.eq.s32.totalorder %s27, 0
      %p142 = por %p140, %p141
      %p143 = scmp.ne.s32.totalorder %s129, %s130
      %p144 = scmp.eq.s32.totalorder %s28, 1
      %p145 = por %p143, %p144
      %p147 = scmp.ne.s32.totalorder %s130, %s146
      %p148 = scmp.eq.s32.totalorder %s28, 0
      %p149 = por %p147, %p148
      %s151 = sadd.s32 %s150, 1
      %p154 = scmp.eq.s32.totalorder %s22, 1
      %p155 = scmp.ne.s32.totalorder %s150, %s152
      %p156 = scmp.eq.s32.totalorder %s22, 0
      %p157 = por %p155, %p156
      %p158 = scmp.ne.s32.totalorder %s150, %s152
      %p159 = scmp.eq.s32.totalorder %s27, 1
      %p160 = por %p158, %p159
      %p161 = scmp.ne.s32.totalorder %s152, %s153
      %p162 = scmp.eq.s32.totalorder %s27, 0
      %p163 = por %p161, %p162
      %p164 = scmp.ne.s32.totalorder %s152, %s153
      %p165 = scmp.eq.s32.totalorder %s28, 1
      %p166 = por %p164, %p165
      %p168 = scmp.ne.s32.totalorder %s153, %s167
      %p169 = scmp.eq.s32.totalorder %s28, 0
      %p170 = por %p168, %p169
      %s172 = sadd.s32 %s171, 1
      %p175 = scmp.eq.s32.totalorder %s22, 1
      %p176 = scmp.ne.s32.totalorder %s171, %s173
      %p177 = scmp.eq.s32.totalorder %s22, 0
      %p178 = por %p176, %p177
      %p179 = scmp.ne.s32.totalorder %s171, %s173
      %p180 = scmp.eq.s32.totalorder %s27, 1
      %p181 = por %p179, %p180
      %p182 = scmp.ne.s32.totalorder %s173, %s174
      %p183 = scmp.eq.s32.totalorder %s27, 0
      %p184 = por %p182, %p183
      %p185 = scmp.ne.s32.totalorder %s173, %s174
      %p186 = scmp.eq.s32.totalorder %s28, 1
      %p187 = por %p185, %p186
      %p189 = scmp.ne.s32.totalorder %s174, %s188
      %p190 = scmp.eq.s32.totalorder %s28, 0
      %p191 = por %p189, %p190
      %s192 = ssub.s32 %s29, %s48
      %p193 = scmp.eq.s32.totalorder %s192, 0
      %s195 = sadd.s32 %s194, 1
      %s196 = scalar_select %p193, %s194, %s195
      %p199 = pneg %p193
      %p200 = scmp.eq.s32.totalorder %s22, 1
      %p201 = por %p199, %p200
      %p202 = scmp.ne.s32.totalorder %s194, %s197
      %p203 = scmp.eq.s32.totalorder %s22, 0
      %p204 = por %p202, %p203
      %p205 = scmp.ne.s32.totalorder %s194, %s197
      %p206 = scmp.eq.s32.totalorder %s27, 1
      %p207 = por %p205, %p206
      %p208 = scmp.ne.s32.totalorder %s197, %s198
      %p209 = scmp.eq.s32.totalorder %s27, 0
      %p210 = por %p208, %p209
      %p211 = scmp.ne.s32.totalorder %s197, %s198
      %p212 = scmp.eq.s32.totalorder %s28, 1
      %p213 = por %p211, %p212
      %p215 = scmp.ne.s32.totalorder %s198, %s214
      %p216 = scmp.eq.s32.totalorder %s28, 0
      %p217 = por %p215, %p216
      %s218 = smul.u32 %s31, %s30
      %s219 = smul.u32 %s40, %s44
      %s220 = ssub.s32 %s29, %s48
      %s221 = ssub.s32 %s218, %s219
      %s222 = sor.u32 %s220, %s221
      %p223 = scmp.eq.s32.totalorder %s222, 0
      %s225 = sadd.s32 %s224, 1
      %s226 = scalar_select %p223, %s224, %s225
      %p229 = pneg %p223
      %p230 = scmp.eq.s32.totalorder %s22, 1
      %p231 = por %p229, %p230
      %p232 = scmp.ne.s32.totalorder %s224, %s227
      %p233 = scmp.eq.s32.totalorder %s22, 0
      %p234 = por %p232, %p233
      %p235 = scmp.ne.s32.totalorder %s224, %s227
      %p236 = scmp.eq.s32.totalorder %s27, 1
      %p237 = por %p235, %p236
      %p238 = scmp.ne.s32.totalorder %s227, %s228
      %p239 = scmp.eq.s32.totalorder %s27, 0
      %p240 = por %p238, %p239
      %p241 = scmp.ne.s32.totalorder %s227, %s228
      %p242 = scmp.eq.s32.totalorder %s28, 1
      %p243 = por %p241, %p242
      %p245 = scmp.ne.s32.totalorder %s228, %s244
      %p246 = scmp.eq.s32.totalorder %s28, 0
      %p247 = por %p245, %p246
      %p248 = scmp.le.s32.totalorder 1, %s22
      %p249 = scmp.lt.s32.totalorder %s22, 3
      %p250 = pnand %p248, %p249
      %p251 = pneg %p250
      // Predicated region
      $region9: #{tpu_custom_call.1} parent=5 // pred_check
        _
      $region10: #{tpu_custom_call.1} parent=5 // pred_check_branch
        %253 = sbr.rel (%p250) target = $region12
      $region11: #{tpu_custom_call.1} parent=5 // pred_region
        %s254 = ssub.s32 %s22, 1
        // Predicated region
        $region13: #{tpu_custom_call.1} parent=11 // pred_check
          %p255 = pneg %p62
        $region14: #{tpu_custom_call.1} parent=11 // pred_check_branch
          %257 = sbr.rel (%p255) target = $region16
        $region15: #{tpu_custom_call.1} parent=11 // pred_region
          _
        $region16: #{tpu_custom_call.1} parent=11 // pred_fallthru
          _
        // Predicated region
        $region17: #{tpu_custom_call.1} parent=11 // pred_check
          %p258 = pneg %p90
        $region18: #{tpu_custom_call.1} parent=11 // pred_check_branch
          %260 = sbr.rel (%p258) target = $region20
        $region19: #{tpu_custom_call.1} parent=11 // pred_region
          %s261 = smul.u32 8, %s32
          %s263 = ssub.s32 512, 512
          %264 = vsyncadd [#allocation8], %s263
          %s265 = sadd.s32 %s34, %s261
          %s266 = smul.addr %s265, 64
          %s267 = scalar_lea.hbm %s1, %s266
          %s268 = sshll.u32 [#allocation7], 4
          %s269 = int_to_ptr.vmem [resolvable:$true] %s268
          %274 = dma.hbm_to_vmem [thread:$0]  %s267, 512, %s269, [#allocation8], 64, 64, 4
        $region20: #{tpu_custom_call.1} parent=11 // pred_fallthru
          _
        // Predicated region
        $region21: #{tpu_custom_call.1} parent=11 // pred_check
          %p275 = pneg %p116
        $region22: #{tpu_custom_call.1} parent=11 // pred_check_branch
          %277 = sbr.rel (%p275) target = $region24
        $region23: #{tpu_custom_call.1} parent=11 // pred_region
          %s278 = smul.u32 16, %s34
          %s280 = ssub.s32 2048, 2048
          %281 = vsyncadd [#allocation11], %s280
          %s282 = smul.addr %s278, 128
          %s283 = scalar_lea.hbm %s2, %s282
          %s284 = sshll.u32 [#allocation10], 4
          %s285 = int_to_ptr.vmem [resolvable:$true] %s284
          %290 = dma.hbm_to_vmem [thread:$0]  %s283, 2048, %s285, [#allocation11], 128, 128, 8
        $region24: #{tpu_custom_call.1} parent=11 // pred_fallthru
          _
        // Predicated region
        $region25: #{tpu_custom_call.1} parent=11 // pred_check
          %p291 = pneg %p142
        $region26: #{tpu_custom_call.1} parent=11 // pred_check_branch
          %293 = sbr.rel (%p291) target = $region28
        $region27: #{tpu_custom_call.1} parent=11 // pred_region
          %s294 = smul.u32 8, %s32
          %s296 = ssub.s32 1024, 1024
          %297 = vsyncadd [#allocation11], %s296
          %s298 = smul.addr %s294, 128
          %s299 = scalar_lea.hbm %s3, %s298
          %s300 = sshll.u32 [#allocation12], 4
          %s301 = int_to_ptr.vmem [resolvable:$true] %s300
          %306 = dma.hbm_to_vmem [thread:$0]  %s299, 1024, %s301, [#allocation11], 128, 128, 8
        $region28: #{tpu_custom_call.1} parent=11 // pred_fallthru
          _
        // Predicated region
        $region29: #{tpu_custom_call.1} parent=11 // pred_check
          %p307 = pneg %p163
        $region30: #{tpu_custom_call.1} parent=11 // pred_check_branch
          %309 = sbr.rel (%p307) target = $region32
        $region31: #{tpu_custom_call.1} parent=11 // pred_region
          %s311 = ssub.s32 2048, 2048
          %312 = vsyncadd [#allocation14], %s311
          %s313 = sshll.u32 [#allocation13], 4
          %s314 = int_to_ptr.vmem [resolvable:$true] %s313
          %319 = dma.hbm_to_vmem [thread:$0]  %s4, 2048, %s314, [#allocation14], 128, 128, 8
        $region32: #{tpu_custom_call.1} parent=11 // pred_fallthru
          _
        // Predicated region
        $region33: #{tpu_custom_call.1} parent=11 // pred_check
          %p320 = pneg %p184
        $region34: #{tpu_custom_call.1} parent=11 // pred_check_branch
          %322 = sbr.rel (%p320) target = $region36
        $region35: #{tpu_custom_call.1} parent=11 // pred_region
          _
        $region36: #{tpu_custom_call.1} parent=11 // pred_fallthru
          _
      $region12: #{tpu_custom_call.1} parent=5 // pred_fallthru
        _
      %p323 = scmp.lt.s32.totalorder %s22, 2
      // Predicated region
      $region37: #{tpu_custom_call.1} parent=5 // pred_check
        %p324 = pneg %p323
      $region38: #{tpu_custom_call.1} parent=5 // pred_check_branch
        %326 = sbr.rel (%p324) target = $region40
      $region39: #{tpu_custom_call.1} parent=5 // pred_region
        _
      $region40: #{tpu_custom_call.1} parent=5 // pred_fallthru
        _
      %p327 = scmp.le.s32.totalorder 1, %s22
      %p328 = scmp.lt.s32.totalorder %s22, 3
      %p329 = pnand %p327, %p328
      %p330 = pneg %p329
      // Predicated region
      $region41: #{tpu_custom_call.1} parent=5 // pred_check
        _
      $region42: #{tpu_custom_call.1} parent=5 // pred_check_branch
        %332 = sbr.rel (%p329) target = $region44
      $region43: #{tpu_custom_call.1} parent=5 // pred_region
        %s333 = ssub.s32 %s22, 1
        // Predicated region
        $region45: #{tpu_custom_call.1} parent=43 // pred_check
          %p334 = pneg %p90
        $region46: #{tpu_custom_call.1} parent=43 // pred_check_branch
          %336 = sbr.rel (%p334) target = $region48
        $region47: #{tpu_custom_call.1} parent=43 // pred_region
          %337 = dma.done [#allocation8], 512
        $region48: #{tpu_custom_call.1} parent=43 // pred_fallthru
          _
        // Predicated region
        $region49: #{tpu_custom_call.1} parent=43 // pred_check
          %p338 = pneg %p116
        $region50: #{tpu_custom_call.1} parent=43 // pred_check_branch
          %340 = sbr.rel (%p338) target = $region52
        $region51: #{tpu_custom_call.1} parent=43 // pred_region
          %341 = dma.done [#allocation11], 2048
        $region52: #{tpu_custom_call.1} parent=43 // pred_fallthru
          _
        // Predicated region
        $region53: #{tpu_custom_call.1} parent=43 // pred_check
          %p342 = pneg %p142
        $region54: #{tpu_custom_call.1} parent=43 // pred_check_branch
          %344 = sbr.rel (%p342) target = $region56
        $region55: #{tpu_custom_call.1} parent=43 // pred_region
          %345 = dma.done [#allocation11], 1024
        $region56: #{tpu_custom_call.1} parent=43 // pred_fallthru
          _
        // Predicated region
        $region57: #{tpu_custom_call.1} parent=43 // pred_check
          %p346 = pneg %p163
        $region58: #{tpu_custom_call.1} parent=43 // pred_check_branch
          %348 = sbr.rel (%p346) target = $region60
        $region59: #{tpu_custom_call.1} parent=43 // pred_region
          %349 = dma.done [#allocation14], 2048
        $region60: #{tpu_custom_call.1} parent=43 // pred_fallthru
          _
        %p350 = pneg %p62
        %p351 = pneg %p59
        %p352 = pneg %p90
        %p353 = pneg %p87
        %p354 = pneg %p116
        %p355 = pneg %p113
        %p356 = pneg %p142
        %p357 = pneg %p139
        %p358 = pneg %p163
        %p359 = pneg %p160
        %p360 = pneg %p184
        %p361 = pneg %p181
        %p362 = pneg %p210
        %p363 = pneg %p207
        %p364 = pneg %p240
        %p365 = pneg %p237
        %s366 = sand.u32 %s227, 1
        %s367 = scalar_lea.sflag [#allocation17], %s366
        %s368 = sand.u32 %s227, 1
        %s369 = smul.addr %s368, 32
        %s370 = scalar_lea.vmem [#allocation16], %s369
        %s371 = smul.u32 8, %s32
        %s372 = smul.u32 16, %s34
        %s373 = smul.u32 8, %s32
        %s374 = smul.u32 8, %s32
        %s375 = smul.u32 %s34, %s33
        %s376 = smul.u32 8, %s32
        %v380 = vld [vmem:[#allocation7] sm:$0xf]
        %v381 = vld [vmem:[#allocation7 + $0x4] sm:$0xf]
        %v382 = vld [vmem:[#allocation7 + $0x8] sm:$0xf]
        %v383 = vld [vmem:[#allocation7 + $0xc] sm:$0xf]
        %v384 = vld [vmem:[#allocation7 + $0x10] sm:$0xf]
        %v385 = vld [vmem:[#allocation7 + $0x14] sm:$0xf]
        %v386 = vld [vmem:[#allocation7 + $0x18] sm:$0xf]
        %v387 = vld [vmem:[#allocation7 + $0x1c] sm:$0xf]
        %vm388 = vcmp.ne.bf16.partialorder %v380, 0
        %vm389 = vcmp.ne.bf16.partialorder %v381, 0
        %vm390 = vcmp.ne.bf16.partialorder %v382, 0
        %vm391 = vcmp.ne.bf16.partialorder %v383, 0
        %vm392 = vcmp.ne.bf16.partialorder %v384, 0
        %vm393 = vcmp.ne.bf16.partialorder %v385, 0
        %vm394 = vcmp.ne.bf16.partialorder %v386, 0
        %vm395 = vcmp.ne.bf16.partialorder %v387, 0
        %v396 = vld [vmem:[#allocation10] sm:$0xff]
        %v397 = vld [vmem:[#allocation10 + $0x8] sm:$0xff]
        %v398 = vld [vmem:[#allocation10 + $0x10] sm:$0xff]
        %v399 = vld [vmem:[#allocation10 + $0x18] sm:$0xff]
        %v400 = vld [vmem:[#allocation10 + $0x20] sm:$0xff]
        %v401 = vld [vmem:[#allocation10 + $0x28] sm:$0xff]
        %v402 = vld [vmem:[#allocation10 + $0x30] sm:$0xff]
        %v403 = vld [vmem:[#allocation10 + $0x38] sm:$0xff]
        %v404 = vld [vmem:[#allocation10 + $0x40] sm:$0xff]
        %v405 = vld [vmem:[#allocation10 + $0x48] sm:$0xff]
        %v406 = vld [vmem:[#allocation10 + $0x50] sm:$0xff]
        %v407 = vld [vmem:[#allocation10 + $0x58] sm:$0xff]
        %v408 = vld [vmem:[#allocation10 + $0x60] sm:$0xff]
        %v409 = vld [vmem:[#allocation10 + $0x68] sm:$0xff]
        %v410 = vld [vmem:[#allocation10 + $0x70] sm:$0xff]
        %v411 = vld [vmem:[#allocation10 + $0x78] sm:$0xff]
        %v412 = vpack.c.bf16 %v397, %v396
        %v413 = vpack.c.bf16 %v399, %v398
        %v414 = vpack.c.bf16 %v401, %v400
        %v415 = vpack.c.bf16 %v403, %v402
        %v416 = vpack.c.bf16 %v405, %v404
        %v417 = vpack.c.bf16 %v407, %v406
        %v418 = vpack.c.bf16 %v409, %v408
        %v419 = vpack.c.bf16 %v411, %v410
        %p420 = scmp.eq.s32.totalorder %s33, 0
        %p421 = scmp.eq.s32.totalorder %s34, 0
        %p422 = pnand %p420, %p421
        %p423 = pneg %p422
        // Predicated region
        $region61: #{tpu_custom_call.1} parent=43 // pred_check
          _
        $region62: #{tpu_custom_call.1} parent=43 // pred_check_branch
          %425 = sbr.rel (%p422) target = $region64
        $region63: #{tpu_custom_call.1} parent=43 // pred_region
          %v426 = vld [vmem:[#allocation12] sm:$0xff]
          %v427 = vld [vmem:[#allocation12 + $0x8] sm:$0xff]
          %v428 = vld [vmem:[#allocation12 + $0x10] sm:$0xff]
          %v429 = vld [vmem:[#allocation12 + $0x18] sm:$0xff]
          %v430 = vld [vmem:[#allocation12 + $0x20] sm:$0xff]
          %v431 = vld [vmem:[#allocation12 + $0x28] sm:$0xff]
          %v432 = vld [vmem:[#allocation12 + $0x30] sm:$0xff]
          %v433 = vld [vmem:[#allocation12 + $0x38] sm:$0xff]
          %434 = vst [vmem:[#allocation2] sm:$0xff] 0.0
          %435 = vst [vmem:[#allocation2 + $0x8] sm:$0xff] 0.0
          %436 = vst [vmem:[#allocation2 + $0x10] sm:$0xff] 0.0
          %437 = vst [vmem:[#allocation2 + $0x18] sm:$0xff] 0.0
          %438 = vst [vmem:[#allocation2 + $0x20] sm:$0xff] 0.0
          %439 = vst [vmem:[#allocation2 + $0x28] sm:$0xff] 0.0
          %440 = vst [vmem:[#allocation2 + $0x30] sm:$0xff] 0.0
          %441 = vst [vmem:[#allocation2 + $0x38] sm:$0xff] 0.0
          %v442 = vtanh.pop %v426
          %v443 = vtanh.pop %v427
          %v444 = vtanh.pop %v428
          %v445 = vtanh.pop %v429
          %v446 = vtanh.pop %v430
          %v447 = vtanh.pop %v431
          %v448 = vtanh.pop %v432
          %v449 = vtanh.pop %v433
          %v450 = vpack.c.bf16 %v443, %v442
          %v451 = vpack.c.bf16 %v445, %v444
          %v452 = vpack.c.bf16 %v447, %v446
          %v453 = vpack.c.bf16 %v449, %v448
          %454 = vst [vmem:[#allocation3] sm:$0xff] %v450
          %455 = vst [vmem:[#allocation3 + $0x8] sm:$0xff] %v451
          %456 = vst [vmem:[#allocation3 + $0x10] sm:$0xff] %v452
          %457 = vst [vmem:[#allocation3 + $0x18] sm:$0xff] %v453
          %vm458 = vcmask 7168
          %459 = vst.msk [vmem:[#allocation4] sm:$0xff] %vm458, -1e+30
          %460 = vst.msk [vmem:[#allocation4 + $0x8] sm:$0xff] %vm458, -1e+30
          %461 = vst.msk [vmem:[#allocation4 + $0x10] sm:$0xff] %vm458, -1e+30
          %462 = vst.msk [vmem:[#allocation4 + $0x18] sm:$0xff] %vm458, -1e+30
          %463 = vst.msk [vmem:[#allocation4 + $0x20] sm:$0xff] %vm458, -1e+30
          %464 = vst.msk [vmem:[#allocation4 + $0x28] sm:$0xff] %vm458, -1e+30
          %465 = vst.msk [vmem:[#allocation4 + $0x30] sm:$0xff] %vm458, -1e+30
          %466 = vst.msk [vmem:[#allocation4 + $0x38] sm:$0xff] %vm458, -1e+30
          %467 = vst.msk [vmem:[#allocation5] sm:$0xff] %vm458, 0.0
          %468 = vst.msk [vmem:[#allocation5 + $0x8] sm:$0xff] %vm458, 0.0
          %469 = vst.msk [vmem:[#allocation5 + $0x10] sm:$0xff] %vm458, 0.0
          %470 = vst.msk [vmem:[#allocation5 + $0x18] sm:$0xff] %vm458, 0.0
          %471 = vst.msk [vmem:[#allocation5 + $0x20] sm:$0xff] %vm458, 0.0
          %472 = vst.msk [vmem:[#allocation5 + $0x28] sm:$0xff] %vm458, 0.0
          %473 = vst.msk [vmem:[#allocation5 + $0x30] sm:$0xff] %vm458, 0.0
          %474 = vst.msk [vmem:[#allocation5 + $0x38] sm:$0xff] %vm458, 0.0
        $region64: #{tpu_custom_call.1} parent=43 // pred_fallthru
          _
        %v475 = vld [vmem:[#allocation3] sm:$0xff]
        %v476 = vld [vmem:[#allocation3 + $0x8] sm:$0xff]
        %v477 = vld [vmem:[#allocation3 + $0x10] sm:$0xff]
        %v478 = vld [vmem:[#allocation3 + $0x18] sm:$0xff]
        %479 = vmatprep.subr.bf16.mxu0 0
        %480 = vmatpush1.bf16.xpose.msra.mxu0 %v412
        %481 = vmatprep.subr.bf16.mxu0 0
        %482 = vmatpush1.bf16.xpose.msra.mxu0 %v413
        %483 = vmatprep.subr.bf16.mxu0 0
        %484 = vmatpush1.bf16.xpose.msra.mxu0 %v414
        %485 = vmatprep.subr.bf16.mxu0 0
        %486 = vmatpush1.bf16.xpose.msra.mxu0 %v415
        %487 = vmatprep.subr.bf16.mxu0 0
        %488 = vmatpush1.bf16.xpose.msra.mxu0 %v416
        %489 = vmatprep.subr.bf16.mxu0 0
        %490 = vmatpush1.bf16.xpose.msra.mxu0 %v417
        %491 = vmatprep.subr.bf16.mxu0 0
        %492 = vmatpush1.bf16.xpose.msra.mxu0 %v418
        %493 = vmatprep.subr.bf16.mxu0 0
        %494 = vmatpush1.bf16.xpose.msra.mxu0 %v419
        %495 = vmatprep.subr.bf16.mxu0 0
        %496 = vmatpush1.bf16.xpose.msra.mxu0 0
        %497 = vmatprep.subr.bf16.mxu0 0
        %498 = vmatpush1.bf16.xpose.msra.mxu0 0
        %499 = vmatprep.subr.bf16.mxu0 0
        %500 = vmatpush1.bf16.xpose.msra.mxu0 0
        %501 = vmatprep.subr.bf16.mxu0 0
        %502 = vmatpush1.bf16.xpose.msra.mxu0 0
        %503 = vmatprep.subr.bf16.mxu0 0
        %504 = vmatpush1.bf16.xpose.msra.mxu0 0
        %505 = vmatprep.subr.bf16.mxu0 0
        %506 = vmatpush1.bf16.xpose.msra.mxu0 0
        %507 = vmatprep.subr.bf16.mxu0 0
        %508 = vmatpush1.bf16.xpose.msra.mxu0 0
        %509 = vmatprep.subr.bf16.mxu0 0
        %510 = vmatpush1.bf16.xpose.msra.mxu0 0
        %511 = vmatprep.mubr.bf16.mxu0 0
        %512 = vmatmul.mubr.bf16.gmra.mrb[0].mxu0 %v475
        %v513 = vpop.f32.mrb[0].mxu0
        %v514 = vadd.f32 0.0, %v513
        %v515 = vpop.f32.mrb[0].mxu0
        %v516 = vpop.f32.mrb[0].mxu0
        %v517 = vadd.f32 0.0, %v516
        %v518 = vpop.f32.mrb[0].mxu0
        %519 = vmatprep.mubr.bf16.mxu0 0
        %520 = vmatmul.mubr.bf16.gmra.mrb[0].mxu0 %v476
        %v521 = vpop.f32.mrb[0].mxu0
        %v522 = vadd.f32 0.0, %v521
        %v523 = vpop.f32.mrb[0].mxu0
        %v524 = vpop.f32.mrb[0].mxu0
        %v525 = vadd.f32 0.0, %v524
        %v526 = vpop.f32.mrb[0].mxu0
        %527 = vmatprep.mubr.bf16.mxu0 0
        %528 = vmatmul.mubr.bf16.gmra.mrb[0].mxu0 %v477
        %v529 = vpop.f32.mrb[0].mxu0
        %v530 = vadd.f32 0.0, %v529
        %v531 = vpop.f32.mrb[0].mxu0
        %v532 = vpop.f32.mrb[0].mxu0
        %v533 = vadd.f32 0.0, %v532
        %v534 = vpop.f32.mrb[0].mxu0
        %535 = vmatprep.mubr.bf16.mxu0 0
        %536 = vmatmul.mubr.bf16.gmra.mrb[0].mxu0 %v478
        %v537 = vpop.f32.mrb[0].mxu0
        %v538 = vadd.f32 0.0, %v537
        %v539 = vpop.f32.mrb[0].mxu0
        %v540 = vpop.f32.mrb[0].mxu0
        %v541 = vadd.f32 0.0, %v540
        %v542 = vpop.f32.mrb[0].mxu0
        %543 = vdwg.mxu0
        %v544 = vsel %vm388, 65537, 0
        %v545 = vsel %vm389, 65537, 0
        %v546 = vsel %vm390, 65537, 0
        %v547 = vsel %vm391, 65537, 0
        %v548 = vsel %vm392, 65537, 0
        %v549 = vsel %vm393, 65537, 0
        %v550 = vsel %vm394, 65537, 0
        %v551 = vsel %vm395, 65537, 0
        %v552 = vunpack.c.l.b16 %v544
        %v553 = vunpack.c.l.b16 %v545
        %v554 = vunpack.c.l.b16 %v546
        %v555 = vunpack.c.l.b16 %v547
        %v556 = vunpack.c.l.b16 %v548
        %v557 = vunpack.c.l.b16 %v549
        %v558 = vunpack.c.l.b16 %v550
        %v559 = vunpack.c.l.b16 %v551
        %vm560 = vcmp.ne.s32.totalorder %v552, 0
        %vm561 = vcmp.ne.s32.totalorder %v553, 0
        %vm562 = vcmp.ne.s32.totalorder %v554, 0
        %vm563 = vcmp.ne.s32.totalorder %v555, 0
        %vm564 = vcmp.ne.s32.totalorder %v556, 0
        %vm565 = vcmp.ne.s32.totalorder %v557, 0
        %vm566 = vcmp.ne.s32.totalorder %v558, 0
        %vm567 = vcmp.ne.s32.totalorder %v559, 0
        %v568 = vsel %vm560, %v514, -1e+30
        %v569 = vsel %vm561, %v517, -1e+30
        %v570 = vsel %vm562, %v522, -1e+30
        %v571 = vsel %vm563, %v525, -1e+30
        %v572 = vsel %vm564, %v530, -1e+30
        %v573 = vsel %vm565, %v533, -1e+30
        %v574 = vsel %vm566, %v538, -1e+30
        %v575 = vsel %vm567, %v541, -1e+30
        // Predicated region
        $region65: #{tpu_custom_call.1} parent=43 // pred_check
          %p576 = pneg %p420
        $region66: #{tpu_custom_call.1} parent=43 // pred_check_branch
          %578 = sbr.rel (%p576) target = $region68
        $region67: #{tpu_custom_call.1} parent=43 // pred_region
          %v579 = vld [vmem:[#allocation2] sm:$0xff]
          %v580 = vld [vmem:[#allocation2 + $0x8] sm:$0xff]
          %v581 = vld [vmem:[#allocation2 + $0x10] sm:$0xff]
          %v582 = vld [vmem:[#allocation2 + $0x18] sm:$0xff]
          %v583 = vld [vmem:[#allocation2 + $0x20] sm:$0xff]
          %v584 = vld [vmem:[#allocation2 + $0x28] sm:$0xff]
          %v585 = vld [vmem:[#allocation2 + $0x30] sm:$0xff]
          %v586 = vld [vmem:[#allocation2 + $0x38] sm:$0xff]
          %v595 = vunpack.c.l.b16 %v380
          %v596 = vunpack.c.l.b16 %v381
          %v597 = vunpack.c.l.b16 %v382
          %v598 = vunpack.c.l.b16 %v383
          %v599 = vunpack.c.l.b16 %v384
          %v600 = vunpack.c.l.b16 %v385
          %v601 = vunpack.c.l.b16 %v386
          %v602 = vunpack.c.l.b16 %v387
          %v603 = vpack.c.b16 %v596, %v595
          %v604 = vpack.c.b16 %v598, %v597
          %v605 = vpack.c.b16 %v600, %v599
          %v606 = vpack.c.b16 %v602, %v601
          %611 = vmatprep.subr.bf16.mxu0 0
          %612 = vmatpush1.bf16.msra.mxu0 %v412
          %613 = vmatprep.subr.bf16.mxu0 0
          %614 = vmatpush1.bf16.msra.mxu0 %v413
          %615 = vmatprep.subr.bf16.mxu0 0
          %616 = vmatpush1.bf16.msra.mxu0 %v414
          %617 = vmatprep.subr.bf16.mxu0 0
          %618 = vmatpush1.bf16.msra.mxu0 %v415
          %619 = vmatprep.subr.bf16.mxu0 0
          %620 = vmatpush1.bf16.msra.mxu0 %v416
          %621 = vmatprep.subr.bf16.mxu0 0
          %622 = vmatpush1.bf16.msra.mxu0 %v417
          %623 = vmatprep.subr.bf16.mxu0 0
          %624 = vmatpush1.bf16.msra.mxu0 %v418
          %625 = vmatprep.subr.bf16.mxu0 0
          %626 = vmatpush1.bf16.msra.mxu0 %v419
          %627 = vmatprep.subr.bf16.mxu0 0
          %628 = vmatpush1.bf16.msra.mxu0 0
          %629 = vmatprep.subr.bf16.mxu0 0
          %630 = vmatpush1.bf16.msra.mxu0 0
          %631 = vmatprep.subr.bf16.mxu0 0
          %632 = vmatpush1.bf16.msra.mxu0 0
          %633 = vmatprep.subr.bf16.mxu0 0
          %634 = vmatpush1.bf16.msra.mxu0 0
          %635 = vmatprep.subr.bf16.mxu0 0
          %636 = vmatpush1.bf16.msra.mxu0 0
          %637 = vmatprep.subr.bf16.mxu0 0
          %638 = vmatpush1.bf16.msra.mxu0 0
          %639 = vmatprep.subr.bf16.mxu0 0
          %640 = vmatpush1.bf16.msra.mxu0 0
          %641 = vmatprep.subr.bf16.mxu0 0
          %642 = vmatpush1.bf16.msra.mxu0 0
          %643 = vmatprep.mubr.bf16.mxu0 0
          %644 = vmatmul.mubr.bf16.gmra.mrb[0].mxu0 %v603
          %v645 = vpop.f32.mrb[0].mxu0
          %v646 = vadd.f32 0.0, %v645
          %v647 = vpop.f32.mrb[0].mxu0
          %v648 = vpop.f32.mrb[0].mxu0
          %v649 = vadd.f32 0.0, %v648
          %v650 = vpop.f32.mrb[0].mxu0
          %651 = vmatprep.mubr.bf16.mxu0 0
          %652 = vmatmul.mubr.bf16.gmra.mrb[0].mxu0 %v604
          %v653 = vpop.f32.mrb[0].mxu0
          %v654 = vadd.f32 0.0, %v653
          %v655 = vpop.f32.mrb[0].mxu0
          %v656 = vpop.f32.mrb[0].mxu0
          %v657 = vadd.f32 0.0, %v656
          %v658 = vpop.f32.mrb[0].mxu0
          %659 = vmatprep.mubr.bf16.mxu0 0
          %660 = vmatmul.mubr.bf16.gmra.mrb[0].mxu0 %v605
          %v661 = vpop.f32.mrb[0].mxu0
          %v662 = vadd.f32 0.0, %v661
          %v663 = vpop.f32.mrb[0].mxu0
          %v664 = vpop.f32.mrb[0].mxu0
          %v665 = vadd.f32 0.0, %v664
          %v666 = vpop.f32.mrb[0].mxu0
          %667 = vmatprep.mubr.bf16.mxu0 0
          %668 = vmatmul.mubr.bf16.gmra.mrb[0].mxu0 %v606
          %v669 = vpop.f32.mrb[0].mxu0
          %v670 = vadd.f32 0.0, %v669
          %v671 = vpop.f32.mrb[0].mxu0
          %v672 = vpop.f32.mrb[0].mxu0
          %v673 = vadd.f32 0.0, %v672
          %v674 = vpop.f32.mrb[0].mxu0
          %675 = vdwg.mxu0
          %v676 = vadd.f32 %v579, %v646
          %v677 = vadd.f32 %v580, %v649
          %v678 = vadd.f32 %v581, %v654
          %v679 = vadd.f32 %v582, %v657
          %v680 = vadd.f32 %v583, %v662
          %v681 = vadd.f32 %v584, %v665
          %v682 = vadd.f32 %v585, %v670
          %v683 = vadd.f32 %v586, %v673
          %684 = vst [vmem:[#allocation2] sm:$0xff] %v676
          %685 = vst [vmem:[#allocation2 + $0x8] sm:$0xff] %v677
          %686 = vst [vmem:[#allocation2 + $0x10] sm:$0xff] %v678
          %687 = vst [vmem:[#allocation2 + $0x18] sm:$0xff] %v679
          %688 = vst [vmem:[#allocation2 + $0x20] sm:$0xff] %v680
          %689 = vst [vmem:[#allocation2 + $0x28] sm:$0xff] %v681
          %690 = vst [vmem:[#allocation2 + $0x30] sm:$0xff] %v682
          %691 = vst [vmem:[#allocation2 + $0x38] sm:$0xff] %v683
          %v692 = vld [vmem:[#allocation4] sm:$0xff]
          %v693 = vld [vmem:[#allocation4 + $0x8] sm:$0xff]
          %v694 = vld [vmem:[#allocation4 + $0x10] sm:$0xff]
          %v695 = vld [vmem:[#allocation4 + $0x18] sm:$0xff]
          %v696 = vld [vmem:[#allocation4 + $0x20] sm:$0xff]
          %v697 = vld [vmem:[#allocation4 + $0x28] sm:$0xff]
          %v698 = vld [vmem:[#allocation4 + $0x30] sm:$0xff]
          %v699 = vld [vmem:[#allocation4 + $0x38] sm:$0xff]
          %700 = vmax.xlane.f32.xlu0 %v568
          %v701 = vpop.xlane.xlu0 %700
          %702 = vmax.xlane.f32.xlu0 %v569
          %v703 = vpop.xlane.xlu0 %702
          %704 = vmax.xlane.f32.xlu0 %v570
          %v705 = vpop.xlane.xlu0 %704
          %706 = vmax.xlane.f32.xlu0 %v571
          %v707 = vpop.xlane.xlu0 %706
          %708 = vmax.xlane.f32.xlu0 %v572
          %v709 = vpop.xlane.xlu0 %708
          %710 = vmax.xlane.f32.xlu0 %v573
          %v711 = vpop.xlane.xlu0 %710
          %712 = vmax.xlane.f32.xlu0 %v574
          %v713 = vpop.xlane.xlu0 %712
          %714 = vmax.xlane.f32.xlu0 %v575
          %v715 = vpop.xlane.xlu0 %714
          %v716 = vmax.f32 %v692, %v701
          %v717 = vmax.f32 %v693, %v703
          %v718 = vmax.f32 %v694, %v705
          %v719 = vmax.f32 %v695, %v707
          %v720 = vmax.f32 %v696, %v709
          %v721 = vmax.f32 %v697, %v711
          %v722 = vmax.f32 %v698, %v713
          %v723 = vmax.f32 %v699, %v715
          %725 = vset.pattern.permute.xlu0 0
          %726 = vperm.xlu0 %725, %v716
          %v727 = vpop.permute.xlu0 %726
          %730 = vset.pattern.permute.xlu0 0
          %731 = vperm.xlu0 %730, %v717
          %v732 = vpop.permute.xlu0 %731
          %735 = vset.pattern.permute.xlu0 0
          %736 = vperm.xlu0 %735, %v718
          %v737 = vpop.permute.xlu0 %736
          %740 = vset.pattern.permute.xlu0 0
          %741 = vperm.xlu0 %740, %v719
          %v742 = vpop.permute.xlu0 %741
          %745 = vset.pattern.permute.xlu0 0
          %746 = vperm.xlu0 %745, %v720
          %v747 = vpop.permute.xlu0 %746
          %750 = vset.pattern.permute.xlu0 0
          %751 = vperm.xlu0 %750, %v721
          %v752 = vpop.permute.xlu0 %751
          %755 = vset.pattern.permute.xlu0 0
          %756 = vperm.xlu0 %755, %v722
          %v757 = vpop.permute.xlu0 %756
          %760 = vset.pattern.permute.xlu0 0
          %761 = vperm.xlu0 %760, %v723
          %v762 = vpop.permute.xlu0 %761
          %v764 = vsub.f32 %v568, %v727
          %v765 = vsub.f32 %v569, %v732
          %v766 = vsub.f32 %v570, %v737
          %v767 = vsub.f32 %v571, %v742
          %v768 = vsub.f32 %v572, %v747
          %v769 = vsub.f32 %v573, %v752
          %v770 = vsub.f32 %v574, %v757
          %v771 = vsub.f32 %v575, %v762
          %v772 = vmul.f32 %v764, 1.442695
          %v773 = vpow.pop %v772
          %v774 = vmul.f32 %v765, 1.442695
          %v775 = vpow.pop %v774
          %v776 = vmul.f32 %v766, 1.442695
          %v777 = vpow.pop %v776
          %v778 = vmul.f32 %v767, 1.442695
          %v779 = vpow.pop %v778
          %v780 = vmul.f32 %v768, 1.442695
          %v781 = vpow.pop %v780
          %v782 = vmul.f32 %v769, 1.442695
          %v783 = vpow.pop %v782
          %v784 = vmul.f32 %v770, 1.442695
          %v785 = vpow.pop %v784
          %v786 = vmul.f32 %v771, 1.442695
          %v787 = vpow.pop %v786
          %v788 = vsel %vm560, %v773, 0.0
          %v789 = vsel %vm561, %v775, 0.0
          %v790 = vsel %vm562, %v777, 0.0
          %v791 = vsel %vm563, %v779, 0.0
          %v792 = vsel %vm564, %v781, 0.0
          %v793 = vsel %vm565, %v783, 0.0
          %v794 = vsel %vm566, %v785, 0.0
          %v795 = vsel %vm567, %v787, 0.0
          %v796 = vsub.f32 %v692, %v716
          %v797 = vsub.f32 %v693, %v717
          %v798 = vsub.f32 %v694, %v718
          %v799 = vsub.f32 %v695, %v719
          %v800 = vsub.f32 %v696, %v720
          %v801 = vsub.f32 %v697, %v721
          %v802 = vsub.f32 %v698, %v722
          %v803 = vsub.f32 %v699, %v723
          %v804 = vmul.f32 %v796, 1.442695
          %v805 = vpow.pop %v804
          %v806 = vmul.f32 %v797, 1.442695
          %v807 = vpow.pop %v806
          %v808 = vmul.f32 %v798, 1.442695
          %v809 = vpow.pop %v808
          %v810 = vmul.f32 %v799, 1.442695
          %v811 = vpow.pop %v810
          %v812 = vmul.f32 %v800, 1.442695
          %v813 = vpow.pop %v812
          %v814 = vmul.f32 %v801, 1.442695
          %v815 = vpow.pop %v814
          %v816 = vmul.f32 %v802, 1.442695
          %v817 = vpow.pop %v816
          %v818 = vmul.f32 %v803, 1.442695
          %v819 = vpow.pop %v818
          %v820 = vld [vmem:[#allocation5] sm:$0xff]
          %v821 = vld [vmem:[#allocation5 + $0x8] sm:$0xff]
          %v822 = vld [vmem:[#allocation5 + $0x10] sm:$0xff]
          %v823 = vld [vmem:[#allocation5 + $0x18] sm:$0xff]
          %v824 = vld [vmem:[#allocation5 + $0x20] sm:$0xff]
          %v825 = vld [vmem:[#allocation5 + $0x28] sm:$0xff]
          %v826 = vld [vmem:[#allocation5 + $0x30] sm:$0xff]
          %v827 = vld [vmem:[#allocation5 + $0x38] sm:$0xff]
          %v828 = vmul.f32 %v805, %v820
          %v829 = vmul.f32 %v807, %v821
          %v830 = vmul.f32 %v809, %v822
          %v831 = vmul.f32 %v811, %v823
          %v832 = vmul.f32 %v813, %v824
          %v833 = vmul.f32 %v815, %v825
          %v834 = vmul.f32 %v817, %v826
          %v835 = vmul.f32 %v819, %v827
          %836 = vadd.xlane.f32.xlu0 %v788
          %v837 = vpop.xlane.xlu0 %836
          %838 = vadd.xlane.f32.xlu0 %v789
          %v839 = vpop.xlane.xlu0 %838
          %840 = vadd.xlane.f32.xlu0 %v790
          %v841 = vpop.xlane.xlu0 %840
          %842 = vadd.xlane.f32.xlu0 %v791
          %v843 = vpop.xlane.xlu0 %842
          %844 = vadd.xlane.f32.xlu0 %v792
          %v845 = vpop.xlane.xlu0 %844
          %846 = vadd.xlane.f32.xlu0 %v793
          %v847 = vpop.xlane.xlu0 %846
          %848 = vadd.xlane.f32.xlu0 %v794
          %v849 = vpop.xlane.xlu0 %848
          %850 = vadd.xlane.f32.xlu0 %v795
          %v851 = vpop.xlane.xlu0 %850
          %v852 = vadd.f32 %v828, %v837
          %v853 = vadd.f32 %v829, %v839
          %v854 = vadd.f32 %v830, %v841
          %v855 = vadd.f32 %v831, %v843
          %v856 = vadd.f32 %v832, %v845
          %v857 = vadd.f32 %v833, %v847
          %v858 = vadd.f32 %v834, %v849
          %v859 = vadd.f32 %v835, %v851
          %vm860 = vcmask 7168
          %861 = vst.msk [vmem:[#allocation5] sm:$0xff] %vm860, %v852
          %862 = vst.msk [vmem:[#allocation5 + $0x8] sm:$0xff] %vm860, %v853
          %863 = vst.msk [vmem:[#allocation5 + $0x10] sm:$0xff] %vm860, %v854
          %864 = vst.msk [vmem:[#allocation5 + $0x18] sm:$0xff] %vm860, %v855
          %865 = vst.msk [vmem:[#allocation5 + $0x20] sm:$0xff] %vm860, %v856
          %866 = vst.msk [vmem:[#allocation5 + $0x28] sm:$0xff] %vm860, %v857
          %867 = vst.msk [vmem:[#allocation5 + $0x30] sm:$0xff] %vm860, %v858
          %868 = vst.msk [vmem:[#allocation5 + $0x38] sm:$0xff] %vm860, %v859
          %869 = vst.msk [vmem:[#allocation4] sm:$0xff] %vm860, %v716
          %870 = vst.msk [vmem:[#allocation4 + $0x8] sm:$0xff] %vm860, %v717
          %871 = vst.msk [vmem:[#allocation4 + $0x10] sm:$0xff] %vm860, %v718
          %872 = vst.msk [vmem:[#allocation4 + $0x18] sm:$0xff] %vm860, %v719
          %873 = vst.msk [vmem:[#allocation4 + $0x20] sm:$0xff] %vm860, %v720
          %874 = vst.msk [vmem:[#allocation4 + $0x28] sm:$0xff] %vm860, %v721
          %875 = vst.msk [vmem:[#allocation4 + $0x30] sm:$0xff] %vm860, %v722
          %876 = vst.msk [vmem:[#allocation4 + $0x38] sm:$0xff] %vm860, %v723
        $region68: #{tpu_custom_call.1} parent=43 // pred_fallthru
          _
        // Predicated region
        $region69: #{tpu_custom_call.1} parent=43 // pred_check
          _
        $region70: #{tpu_custom_call.1} parent=43 // pred_check_branch
          %878 = sbr.rel (%p422) target = $region72
        $region71: #{tpu_custom_call.1} parent=43 // pred_region
          %v879 = vld [vmem:[#allocation12] sm:$0xff]
          %v880 = vld [vmem:[#allocation12 + $0x8] sm:$0xff]
          %v881 = vld [vmem:[#allocation12 + $0x10] sm:$0xff]
          %v882 = vld [vmem:[#allocation12 + $0x18] sm:$0xff]
          %v883 = vld [vmem:[#allocation12 + $0x20] sm:$0xff]
          %v884 = vld [vmem:[#allocation12 + $0x28] sm:$0xff]
          %v885 = vld [vmem:[#allocation12 + $0x30] sm:$0xff]
          %v886 = vld [vmem:[#allocation12 + $0x38] sm:$0xff]
          %s887 = sld [smem:[#allocation6]]
          %s888 = sadd.f32 %s887, 1.0
          %v889 = vstv %s888
          %v890 = vmul.f32 %v889, %v879
          %v891 = vmul.f32 %v889, %v880
          %v892 = vmul.f32 %v889, %v881
          %v893 = vmul.f32 %v889, %v882
          %v894 = vmul.f32 %v889, %v883
          %v895 = vmul.f32 %v889, %v884
          %v896 = vmul.f32 %v889, %v885
          %v897 = vmul.f32 %v889, %v886
          %v898 = vld [vmem:[#allocation2] sm:$0xff]
          %v899 = vld [vmem:[#allocation2 + $0x8] sm:$0xff]
          %v900 = vld [vmem:[#allocation2 + $0x10] sm:$0xff]
          %v901 = vld [vmem:[#allocation2 + $0x18] sm:$0xff]
          %v902 = vld [vmem:[#allocation2 + $0x20] sm:$0xff]
          %v903 = vld [vmem:[#allocation2 + $0x28] sm:$0xff]
          %v904 = vld [vmem:[#allocation2 + $0x30] sm:$0xff]
          %v905 = vld [vmem:[#allocation2 + $0x38] sm:$0xff]
          %v906 = vadd.f32 %v890, %v898
          %v907 = vadd.f32 %v891, %v899
          %v908 = vadd.f32 %v892, %v900
          %v909 = vadd.f32 %v893, %v901
          %v910 = vadd.f32 %v894, %v902
          %v911 = vadd.f32 %v895, %v903
          %v912 = vadd.f32 %v896, %v904
          %v913 = vadd.f32 %v897, %v905
          %v914 = vld [vmem:[#allocation13] sm:$0xff]
          %v915 = vld [vmem:[#allocation13 + $0x8] sm:$0xff]
          %v916 = vld [vmem:[#allocation13 + $0x10] sm:$0xff]
          %v917 = vld [vmem:[#allocation13 + $0x18] sm:$0xff]
          %v918 = vld [vmem:[#allocation13 + $0x20] sm:$0xff]
          %v919 = vld [vmem:[#allocation13 + $0x28] sm:$0xff]
          %v920 = vld [vmem:[#allocation13 + $0x30] sm:$0xff]
          %v921 = vld [vmem:[#allocation13 + $0x38] sm:$0xff]
          %v922 = vld [vmem:[#allocation13 + $0x40] sm:$0xff]
          %v923 = vld [vmem:[#allocation13 + $0x48] sm:$0xff]
          %v924 = vld [vmem:[#allocation13 + $0x50] sm:$0xff]
          %v925 = vld [vmem:[#allocation13 + $0x58] sm:$0xff]
          %v926 = vld [vmem:[#allocation13 + $0x60] sm:$0xff]
          %v927 = vld [vmem:[#allocation13 + $0x68] sm:$0xff]
          %v928 = vld [vmem:[#allocation13 + $0x70] sm:$0xff]
          %v929 = vld [vmem:[#allocation13 + $0x78] sm:$0xff]
          %v930 = vld [vmem:[%s5] sm:$0x1]
          %v932 = vlaneseq
          %v933 = vshrl.u32 %v932, 7
          %v934 = vsub.s32 0, %v933
          %v935 = vrot.slane %v930, %v934
          %937 = vmatprep.subr.mxu0 0.0
          %938 = vmatpush1.msra.mxu0 %v914
          %939 = vmatprep.subr.mxu0 0.0
          %940 = vmatpush1.msra.mxu0 %v915
          %941 = vmatprep.subr.mxu0 0.0
          %942 = vmatpush1.msra.mxu0 %v916
          %943 = vmatprep.subr.mxu0 0.0
          %944 = vmatpush1.msra.mxu0 %v917
          %945 = vmatprep.subr.mxu0 0.0
          %946 = vmatpush1.msra.mxu0 %v918
          %947 = vmatprep.subr.mxu0 0.0
          %948 = vmatpush1.msra.mxu0 %v919
          %949 = vmatprep.subr.mxu0 0.0
          %950 = vmatpush1.msra.mxu0 %v920
          %951 = vmatprep.subr.mxu0 0.0
          %952 = vmatpush1.msra.mxu0 %v921
          %953 = vmatprep.subr.mxu0 0.0
          %954 = vmatpush1.msra.mxu0 %v922
          %955 = vmatprep.subr.mxu0 0.0
          %956 = vmatpush1.msra.mxu0 %v923
          %957 = vmatprep.subr.mxu0 0.0
          %958 = vmatpush1.msra.mxu0 %v924
          %959 = vmatprep.subr.mxu0 0.0
          %960 = vmatpush1.msra.mxu0 %v925
          %961 = vmatprep.subr.mxu0 0.0
          %962 = vmatpush1.msra.mxu0 %v926
          %963 = vmatprep.subr.mxu0 0.0
          %964 = vmatpush1.msra.mxu0 %v927
          %965 = vmatprep.subr.mxu0 0.0
          %966 = vmatpush1.msra.mxu0 %v928
          %967 = vmatprep.subr.mxu0 0.0
          %968 = vmatpush1.msra.mxu0 %v929
          %969 = vmatprep.subr.mxu0 0.0
          %970 = vmatpush1.msra.mxu0 0.0
          %971 = vmatprep.subr.mxu0 0.0
          %972 = vmatpush1.msra.mxu0 0.0
          %973 = vmatprep.subr.mxu0 0.0
          %974 = vmatpush1.msra.mxu0 0.0
          %975 = vmatprep.subr.mxu0 0.0
          %976 = vmatpush1.msra.mxu0 0.0
          %977 = vmatprep.subr.mxu0 0.0
          %978 = vmatpush1.msra.mxu0 0.0
          %979 = vmatprep.subr.mxu0 0.0
          %980 = vmatpush1.msra.mxu0 0.0
          %981 = vmatprep.subr.mxu0 0.0
          %982 = vmatpush1.msra.mxu0 0.0
          %983 = vmatprep.subr.mxu0 0.0
          %984 = vmatpush1.msra.mxu0 0.0
          %985 = vmatprep.subr.mxu0 0.0
          %986 = vmatpush1.msra.mxu0 0.0
          %987 = vmatprep.subr.mxu0 0.0
          %988 = vmatpush1.msra.mxu0 0.0
          %989 = vmatprep.subr.mxu0 0.0
          %990 = vmatpush1.msra.mxu0 0.0
          %991 = vmatprep.subr.mxu0 0.0
          %992 = vmatpush1.msra.mxu0 0.0
          %993 = vmatprep.subr.mxu0 0.0
          %994 = vmatpush1.msra.mxu0 0.0
          %995 = vmatprep.subr.mxu0 0.0
          %996 = vmatpush1.msra.mxu0 0.0
          %997 = vmatprep.subr.mxu0 0.0
          %998 = vmatpush1.msra.mxu0 0.0
          %999 = vmatprep.subr.mxu0 0.0
          %1000 = vmatpush1.msra.mxu0 0.0
          %1001 = vmatprep.mubr.f32.mxu0 0.0
          %1002 = vmatmul.mubr.f32.gmra.mrb[0].mxu0 %v906
          %v1003 = vpop.f32.mrb[0].mxu0
          %v1004 = vadd.f32 %v935, %v1003
          %v1005 = vpop.f32.mrb[0].mxu0
          %1006 = vmatprep.mubr.f32.mxu0 0.0
          %1007 = vmatmul.mubr.f32.gmra.mrb[0].mxu0 %v907
          %v1008 = vpop.f32.mrb[0].mxu0
          %v1009 = vadd.f32 %v935, %v1008
          %v1010 = vpop.f32.mrb[0].mxu0
          %1011 = vmatprep.mubr.f32.mxu0 0.0
          %1012 = vmatmul.mubr.f32.gmra.mrb[0].mxu0 %v908
          %v1013 = vpop.f32.mrb[0].mxu0
          %v1014 = vadd.f32 %v935, %v1013
          %v1015 = vpop.f32.mrb[0].mxu0
          %1016 = vmatprep.mubr.f32.mxu0 0.0
          %1017 = vmatmul.mubr.f32.gmra.mrb[0].mxu0 %v909
          %v1018 = vpop.f32.mrb[0].mxu0
          %v1019 = vadd.f32 %v935, %v1018
          %v1020 = vpop.f32.mrb[0].mxu0
          %1021 = vmatprep.mubr.f32.mxu0 0.0
          %1022 = vmatmul.mubr.f32.gmra.mrb[0].mxu0 %v910
          %v1023 = vpop.f32.mrb[0].mxu0
          %v1024 = vadd.f32 %v935, %v1023
          %v1025 = vpop.f32.mrb[0].mxu0
          %1026 = vmatprep.mubr.f32.mxu0 0.0
          %1027 = vmatmul.mubr.f32.gmra.mrb[0].mxu0 %v911
          %v1028 = vpop.f32.mrb[0].mxu0
          %v1029 = vadd.f32 %v935, %v1028
          %v1030 = vpop.f32.mrb[0].mxu0
          %1031 = vmatprep.mubr.f32.mxu0 0.0
          %1032 = vmatmul.mubr.f32.gmra.mrb[0].mxu0 %v912
          %v1033 = vpop.f32.mrb[0].mxu0
          %v1034 = vadd.f32 %v935, %v1033
          %v1035 = vpop.f32.mrb[0].mxu0
          %1036 = vmatprep.mubr.f32.mxu0 0.0
          %1037 = vmatmul.mubr.f32.gmra.mrb[0].mxu0 %v913
          %v1038 = vpop.f32.mrb[0].mxu0
          %v1039 = vadd.f32 %v935, %v1038
          %v1040 = vpop.f32.mrb[0].mxu0
          %1041 = vdwg.mxu0
          %1042 = vst [vmem:[#allocation15] sm:$0xff] %v1004
          %1043 = vst [vmem:[#allocation15 + $0x8] sm:$0xff] %v1009
          %1044 = vst [vmem:[#allocation15 + $0x10] sm:$0xff] %v1014
          %1045 = vst [vmem:[#allocation15 + $0x18] sm:$0xff] %v1019
          %1046 = vst [vmem:[#allocation15 + $0x20] sm:$0xff] %v1024
          %1047 = vst [vmem:[#allocation15 + $0x28] sm:$0xff] %v1029
          %1048 = vst [vmem:[#allocation15 + $0x30] sm:$0xff] %v1034
          %1049 = vst [vmem:[#allocation15 + $0x38] sm:$0xff] %v1039
          %v1050 = vld [vmem:[#allocation5] sm:$0xff]
          %v1051 = vld [vmem:[#allocation5 + $0x8] sm:$0xff]
          %v1052 = vld [vmem:[#allocation5 + $0x10] sm:$0xff]
          %v1053 = vld [vmem:[#allocation5 + $0x18] sm:$0xff]
          %v1054 = vld [vmem:[#allocation5 + $0x20] sm:$0xff]
          %v1055 = vld [vmem:[#allocation5 + $0x28] sm:$0xff]
          %v1056 = vld [vmem:[#allocation5 + $0x30] sm:$0xff]
          %v1057 = vld [vmem:[#allocation5 + $0x38] sm:$0xff]
          %vm1058 = vcmp.eq.f32.partialorder %v1050, 0.0
          %vm1059 = vcmp.eq.f32.partialorder %v1051, 0.0
          %vm1060 = vcmp.eq.f32.partialorder %v1052, 0.0
          %vm1061 = vcmp.eq.f32.partialorder %v1053, 0.0
          %vm1062 = vcmp.eq.f32.partialorder %v1054, 0.0
          %vm1063 = vcmp.eq.f32.partialorder %v1055, 0.0
          %vm1064 = vcmp.eq.f32.partialorder %v1056, 0.0
          %vm1065 = vcmp.eq.f32.partialorder %v1057, 0.0
          %v1066 = vsel %vm1058, 1.0, %v1050
          %v1067 = vsel %vm1059, 1.0, %v1051
          %v1068 = vsel %vm1060, 1.0, %v1052
          %v1069 = vsel %vm1061, 1.0, %v1053
          %v1070 = vsel %vm1062, 1.0, %v1054
          %v1071 = vsel %vm1063, 1.0, %v1055
          %v1072 = vsel %vm1064, 1.0, %v1056
          %v1073 = vsel %vm1065, 1.0, %v1057
          %v1074 = vrcp.pop %v1066
          %v1075 = vmul.f32 1.0, %v1074
          %v1076 = vrcp.pop %v1067
          %v1077 = vmul.f32 1.0, %v1076
          %v1078 = vrcp.pop %v1068
          %v1079 = vmul.f32 1.0, %v1078
          %v1080 = vrcp.pop %v1069
          %v1081 = vmul.f32 1.0, %v1080
          %v1082 = vrcp.pop %v1070
          %v1083 = vmul.f32 1.0, %v1082
          %v1084 = vrcp.pop %v1071
          %v1085 = vmul.f32 1.0, %v1084
          %v1086 = vrcp.pop %v1072
          %v1087 = vmul.f32 1.0, %v1086
          %v1088 = vrcp.pop %v1073
          %v1089 = vmul.f32 1.0, %v1088
          %vm1090 = vcmask 7168
          %1091 = vst.msk [vmem:[#allocation5] sm:$0xff] %vm1090, %v1075
          %1092 = vst.msk [vmem:[#allocation5 + $0x8] sm:$0xff] %vm1090, %v1077
          %1093 = vst.msk [vmem:[#allocation5 + $0x10] sm:$0xff] %vm1090, %v1079
          %1094 = vst.msk [vmem:[#allocation5 + $0x18] sm:$0xff] %vm1090, %v1081
          %1095 = vst.msk [vmem:[#allocation5 + $0x20] sm:$0xff] %vm1090, %v1083
          %1096 = vst.msk [vmem:[#allocation5 + $0x28] sm:$0xff] %vm1090, %v1085
          %1097 = vst.msk [vmem:[#allocation5 + $0x30] sm:$0xff] %vm1090, %v1087
          %1098 = vst.msk [vmem:[#allocation5 + $0x38] sm:$0xff] %vm1090, %v1089
        $region72: #{tpu_custom_call.1} parent=43 // pred_fallthru
          _
        %p1099 = scmp.eq.s32.totalorder %s33, 1
        // Predicated region
        $region73: #{tpu_custom_call.1} parent=43 // pred_check
          %p1100 = pneg %p1099
        $region74: #{tpu_custom_call.1} parent=43 // pred_check_branch
          %1102 = sbr.rel (%p1100) target = $region76
        $region75: #{tpu_custom_call.1} parent=43 // pred_region
          %v1103 = vld [vmem:[#allocation4] sm:$0xff]
          %v1104 = vld [vmem:[#allocation4 + $0x8] sm:$0xff]
          %v1105 = vld [vmem:[#allocation4 + $0x10] sm:$0xff]
          %v1106 = vld [vmem:[#allocation4 + $0x18] sm:$0xff]
          %v1107 = vld [vmem:[#allocation4 + $0x20] sm:$0xff]
          %v1108 = vld [vmem:[#allocation4 + $0x28] sm:$0xff]
          %v1109 = vld [vmem:[#allocation4 + $0x30] sm:$0xff]
          %v1110 = vld [vmem:[#allocation4 + $0x38] sm:$0xff]
          %1112 = vset.pattern.permute.xlu0 0
          %1113 = vperm.xlu0 %1112, %v1103
          %v1114 = vpop.permute.xlu0 %1113
          %1117 = vset.pattern.permute.xlu0 0
          %1118 = vperm.xlu0 %1117, %v1104
          %v1119 = vpop.permute.xlu0 %1118
          %1122 = vset.pattern.permute.xlu0 0
          %1123 = vperm.xlu0 %1122, %v1105
          %v1124 = vpop.permute.xlu0 %1123
          %1127 = vset.pattern.permute.xlu0 0
          %1128 = vperm.xlu0 %1127, %v1106
          %v1129 = vpop.permute.xlu0 %1128
          %1132 = vset.pattern.permute.xlu0 0
          %1133 = vperm.xlu0 %1132, %v1107
          %v1134 = vpop.permute.xlu0 %1133
          %1137 = vset.pattern.permute.xlu0 0
          %1138 = vperm.xlu0 %1137, %v1108
          %v1139 = vpop.permute.xlu0 %1138
          %1142 = vset.pattern.permute.xlu0 0
          %1143 = vperm.xlu0 %1142, %v1109
          %v1144 = vpop.permute.xlu0 %1143
          %1147 = vset.pattern.permute.xlu0 0
          %1148 = vperm.xlu0 %1147, %v1110
          %v1149 = vpop.permute.xlu0 %1148
          %v1151 = vsub.f32 %v568, %v1114
          %v1152 = vsub.f32 %v569, %v1119
          %v1153 = vsub.f32 %v570, %v1124
          %v1154 = vsub.f32 %v571, %v1129
          %v1155 = vsub.f32 %v572, %v1134
          %v1156 = vsub.f32 %v573, %v1139
          %v1157 = vsub.f32 %v574, %v1144
          %v1158 = vsub.f32 %v575, %v1149
          %v1159 = vmul.f32 %v1151, 1.442695
          %v1160 = vpow.pop %v1159
          %v1161 = vmul.f32 %v1152, 1.442695
          %v1162 = vpow.pop %v1161
          %v1163 = vmul.f32 %v1153, 1.442695
          %v1164 = vpow.pop %v1163
          %v1165 = vmul.f32 %v1154, 1.442695
          %v1166 = vpow.pop %v1165
          %v1167 = vmul.f32 %v1155, 1.442695
          %v1168 = vpow.pop %v1167
          %v1169 = vmul.f32 %v1156, 1.442695
          %v1170 = vpow.pop %v1169
          %v1171 = vmul.f32 %v1157, 1.442695
          %v1172 = vpow.pop %v1171
          %v1173 = vmul.f32 %v1158, 1.442695
          %v1174 = vpow.pop %v1173
          %v1175 = vsel %vm560, %v1160, 0.0
          %v1176 = vsel %vm561, %v1162, 0.0
          %v1177 = vsel %vm562, %v1164, 0.0
          %v1178 = vsel %vm563, %v1166, 0.0
          %v1179 = vsel %vm564, %v1168, 0.0
          %v1180 = vsel %vm565, %v1170, 0.0
          %v1181 = vsel %vm566, %v1172, 0.0
          %v1182 = vsel %vm567, %v1174, 0.0
          %v1183 = vld [vmem:[#allocation5] sm:$0xff]
          %v1184 = vld [vmem:[#allocation5 + $0x8] sm:$0xff]
          %v1185 = vld [vmem:[#allocation5 + $0x10] sm:$0xff]
          %v1186 = vld [vmem:[#allocation5 + $0x18] sm:$0xff]
          %v1187 = vld [vmem:[#allocation5 + $0x20] sm:$0xff]
          %v1188 = vld [vmem:[#allocation5 + $0x28] sm:$0xff]
          %v1189 = vld [vmem:[#allocation5 + $0x30] sm:$0xff]
          %v1190 = vld [vmem:[#allocation5 + $0x38] sm:$0xff]
          %1192 = vset.pattern.permute.xlu0 0
          %1193 = vperm.xlu0 %1192, %v1183
          %v1194 = vpop.permute.xlu0 %1193
          %1197 = vset.pattern.permute.xlu0 0
          %1198 = vperm.xlu0 %1197, %v1184
          %v1199 = vpop.permute.xlu0 %1198
          %1202 = vset.pattern.permute.xlu0 0
          %1203 = vperm.xlu0 %1202, %v1185
          %v1204 = vpop.permute.xlu0 %1203
          %1207 = vset.pattern.permute.xlu0 0
          %1208 = vperm.xlu0 %1207, %v1186
          %v1209 = vpop.permute.xlu0 %1208
          %1212 = vset.pattern.permute.xlu0 0
          %1213 = vperm.xlu0 %1212, %v1187
          %v1214 = vpop.permute.xlu0 %1213
          %1217 = vset.pattern.permute.xlu0 0
          %1218 = vperm.xlu0 %1217, %v1188
          %v1219 = vpop.permute.xlu0 %1218
          %1222 = vset.pattern.permute.xlu0 0
          %1223 = vperm.xlu0 %1222, %v1189
          %v1224 = vpop.permute.xlu0 %1223
          %1227 = vset.pattern.permute.xlu0 0
          %1228 = vperm.xlu0 %1227, %v1190
          %v1229 = vpop.permute.xlu0 %1228
          %v1231 = vmul.f32 %v1175, %v1194
          %v1232 = vmul.f32 %v1176, %v1199
          %v1233 = vmul.f32 %v1177, %v1204
          %v1234 = vmul.f32 %v1178, %v1209
          %v1235 = vmul.f32 %v1179, %v1214
          %v1236 = vmul.f32 %v1180, %v1219
          %v1237 = vmul.f32 %v1181, %v1224
          %v1238 = vmul.f32 %v1182, %v1229
          %v1239 = vpack.c.bf16 %v1232, %v1231
          %v1240 = vpack.c.bf16 %v1234, %v1233
          %v1241 = vpack.c.bf16 %v1236, %v1235
          %v1242 = vpack.c.bf16 %v1238, %v1237
          %v1247 = vunpack.c.l.b16 %v1239
          %v1248 = vunpack.c.h.b16 %v1239
          %v1249 = vunpack.c.l.b16 %v1240
          %v1250 = vunpack.c.h.b16 %v1240
          %v1251 = vunpack.c.l.b16 %v1241
          %v1252 = vunpack.c.h.b16 %v1241
          %v1253 = vunpack.c.l.b16 %v1242
          %v1254 = vunpack.c.h.b16 %v1242
          %v1255 = vpack.c.b16 %v1247, %v1247
          %v1256 = vpack.c.b16 %v1248, %v1248
          %v1257 = vpack.c.b16 %v1249, %v1249
          %v1258 = vpack.c.b16 %v1250, %v1250
          %v1259 = vpack.c.b16 %v1251, %v1251
          %v1260 = vpack.c.b16 %v1252, %v1252
          %v1261 = vpack.c.b16 %v1253, %v1253
          %v1262 = vpack.c.b16 %v1254, %v1254
          %1271 = vst [vmem:[%s370] sm:$0xf] %v1255
          %1272 = vst [vmem:[%s370 + $0x4] sm:$0xf] %v1256
          %1273 = vst [vmem:[%s370 + $0x8] sm:$0xf] %v1257
          %1274 = vst [vmem:[%s370 + $0xc] sm:$0xf] %v1258
          %1275 = vst [vmem:[%s370 + $0x10] sm:$0xf] %v1259
          %1276 = vst [vmem:[%s370 + $0x14] sm:$0xf] %v1260
          %1277 = vst [vmem:[%s370 + $0x18] sm:$0xf] %v1261
          %1278 = vst [vmem:[%s370 + $0x1c] sm:$0xf] %v1262
        $region76: #{tpu_custom_call.1} parent=43 // pred_fallthru
          _
        %s1279 = sand.u32 %s227, 1
        %s1280 = scalar_lea.sflag [#allocation17], %s1279
        %s1281 = sand.u32 %s227, 1
        %s1282 = smul.addr %s1281, 32
        %s1283 = scalar_lea.vmem [#allocation16], %s1282
        // Predicated region
        $region77: #{tpu_custom_call.1} parent=43 // pred_check
          %p1284 = pneg %p207
        $region78: #{tpu_custom_call.1} parent=43 // pred_check_branch
          %1286 = sbr.rel (%p1284) target = $region80
        $region79: #{tpu_custom_call.1} parent=43 // pred_region
          %s1287 = smul.u32 8, %s32
          %s1289 = ssub.s32 1024, 1024
          %1290 = vsyncadd [#allocation9], %s1289
          %s1291 = smul.addr %s1287, 128
          %s1292 = scalar_lea.hbm %s6, %s1291
          %s1293 = sshll.u32 [#allocation15], 4
          %s1294 = int_to_ptr.vmem [resolvable:$true] %s1293
          %1299 = dma.vmem_to_hbm [thread:$0]  %s1294, 1024, %s1292, [#allocation9], 128, 128, 8
        $region80: #{tpu_custom_call.1} parent=43 // pred_fallthru
          _
        // Predicated region
        $region81: #{tpu_custom_call.1} parent=43 // pred_check
          %p1300 = pneg %p237
        $region82: #{tpu_custom_call.1} parent=43 // pred_check_branch
          %1302 = sbr.rel (%p1300) target = $region84
        $region83: #{tpu_custom_call.1} parent=43 // pred_region
          %s1303 = smul.u32 %s34, %s33
          %s1304 = smul.u32 8, %s32
          %s1306 = ssub.s32 512, 512
          %1307 = vsyncadd %s1280, %s1306
          %s1308 = sadd.s32 %s1303, %s1304
          %s1309 = smul.addr %s1308, 64
          %s1310 = scalar_lea.hbm %s7, %s1309
          %s1311 = sshll.u32 %s1283, 4
          %s1312 = int_to_ptr.vmem [resolvable:$true] %s1311
          %1317 = dma.vmem_to_hbm [thread:$0]  %s1312, 512, %s1310, %s1280, 64, 64, 4
        $region84: #{tpu_custom_call.1} parent=43 // pred_fallthru
          _
        // Predicated region
        $region85: #{tpu_custom_call.1} parent=43 // pred_check
          %p1318 = pneg %p207
        $region86: #{tpu_custom_call.1} parent=43 // pred_check_branch
          %1320 = sbr.rel (%p1318) target = $region88
        $region87: #{tpu_custom_call.1} parent=43 // pred_region
          %1321 = dma.done [#allocation9], 1024
        $region88: #{tpu_custom_call.1} parent=43 // pred_fallthru
          _
      $region44: #{tpu_custom_call.1} parent=5 // pred_fallthru
        _
      %p1322 = scmp.le.s32.totalorder 2, %s22
      // Predicated region
      $region89: #{tpu_custom_call.1} parent=5 // pred_check
        %p1323 = pneg %p1322
      $region90: #{tpu_custom_call.1} parent=5 // pred_check_branch
        %1325 = sbr.rel (%p1323) target = $region92
      $region91: #{tpu_custom_call.1} parent=5 // pred_region
        %s1326 = ssub.s32 %s22, 2
        // Predicated region
        $region93: #{tpu_custom_call.1} parent=91 // pred_check
          %p1327 = pneg %p243
        $region94: #{tpu_custom_call.1} parent=91 // pred_check_branch
          %1329 = sbr.rel (%p1327) target = $region96
        $region95: #{tpu_custom_call.1} parent=91 // pred_region
          %s1330 = sand.u32 %s228, 1
          %s1331 = scalar_lea.sflag [#allocation17], %s1330
          %s1332 = sand.u32 %s228, 1
          %s1333 = smul.addr %s1332, 32
          %s1334 = scalar_lea.vmem [#allocation16], %s1333
          %1335 = dma.done %s1331, 512
        $region96: #{tpu_custom_call.1} parent=91 // pred_fallthru
          _
      $region92: #{tpu_custom_call.1} parent=5 // pred_fallthru
        _
    $region6: #{tpu_custom_call.1} parent=1 // loop_footer
      %s26 = sadd.s32 1, %s22
    $region7: #{tpu_custom_call.1} parent=1 // loop_footer_branch
      %21 = sbr.rel target = $region3
    $region8: #{tpu_custom_call.1} parent=1 // loop_exit
      _
    %1336 = vsyncpa [#allocation8], 1
    %s1337 = scalar_lea.sflag [#allocation8], 1
    %1338 = vsyncpa %s1337, 1
    %1339 = vsyncpa [#allocation11], 1
    %1340 = vsyncpa [#allocation14], 1
    %1341 = vsyncpa [#allocation9], 1
    %s1342 = scalar_lea.sflag [#allocation9], 1
    %1343 = vsyncpa %s1342, 1
    %1344 = vsyncpa [#allocation17], 1
    %s1345 = scalar_lea.sflag [#allocation17], 1
    %1346 = vsyncpa %s1345, 1

</llo_original>
